<compile_context>
chip_gen: v7x
topology: tpu7x:2x2x1
jax: 0.10.0
libtpu: 0.0.40
codegen_flags: <defaults>
</compile_context>

<pallas_src>
import functools

import jax
import jax.numpy as jnp
import numpy as np
from jax.experimental import pallas as pl
from jax.experimental.pallas import tpu as pltpu


PARAM_ORDER = ("w_sep", "b_sep", "w_1x1", "b_1x1", "g1", "beta1", "g2", "beta2")

_INV_SQRT2 = 0.7071067811865476


def _erf_approx(z):
    # Abramowitz & Stegun 7.1.26, |error| <= 1.5e-7 vs true erf.
    a1, a2, a3, a4, a5 = 0.254829592, -0.284496736, 1.421413741, -1.453152027, 1.061405429
    p = 0.3275911
    sign = jnp.where(z >= 0.0, 1.0, -1.0)
    za = jnp.abs(z)
    t = 1.0 / (1.0 + p * za)
    poly = t * (a1 + t * (a2 + t * (a3 + t * (a4 + t * a5))))
    return sign * (1.0 - poly * jnp.exp(-za * za))


def _gelu(x):
    # Exact (erf-based) GELU, matching PyTorch F.gelu default, to ~1e-7.
    return 0.5 * x * (1.0 + _erf_approx(x * _INV_SQRT2))


def _layer_norm_channels(y, gamma, beta, eps=1e-4):
    # LayerNorm2: normalize over the channel axis (axis 0 of a [C, T] tile).
    mean = jnp.mean(y, axis=0, keepdims=True)
    var = jnp.mean((y - mean) ** 2, axis=0, keepdims=True)
    return (y - mean) * jax.lax.rsqrt(var + eps) * gamma + beta


def ddsconv_kernel(kernel_size, num_layers,
                   x_ref, mask_ref,
                   wsep_ref, bsep_ref, w11_ref, b11_ref,
                   g1_ref, be1_ref, g2_ref, be2_ref,
                   o_ref):
    # One grid step = one batch element; all layers fused (x stays in VMEM).
    x = x_ref[0].astype(jnp.float32)          # [C, T]
    mask = mask_ref[0].astype(jnp.float32)    # [1, T]
    C, T = x.shape

    wsep = wsep_ref[...]                      # [L, C, K]  depthwise taps
    bsep = bsep_ref[...]                      # [L, C, 1]
    w11b = w11_ref[...].astype(jnp.bfloat16)  # [L, C, C]  bf16 MXU inputs (cast once)
    b11 = b11_ref[...]                        # [L, C, 1]
    g1 = g1_ref[...]
    be1 = be1_ref[...]
    g2 = g2_ref[...]
    be2 = be2_ref[...]

    for i in range(num_layers):               # static unroll; num_layers is small
        dil = kernel_size ** i
        pad = (kernel_size * dil - dil) // 2

        # --- depthwise dilated conv on the masked input (VPU) ----------------
        xm = x * mask
        if pad > 0:
            zpad = jnp.zeros((C, pad), jnp.float32)
            xp = jnp.concatenate([zpad, xm, zpad], axis=1)   # [C, T + 2*pad]
        else:
            xp = xm
        y = jnp.zeros((C, T), jnp.float32)
        for j in range(kernel_size):          # K shifted full-width multiply-adds
            y = y + wsep[i, :, j:j + 1] * xp[:, j * dil:j * dil + T]
        y = y + bsep[i]

        y = _gelu(_layer_norm_channels(y, g1[i], be1[i]))

        # --- 1x1 conv == [C, C] x [C, T] MXU matmul (bf16 in, f32 acc) -------
        y = jnp.dot(w11b[i], y.astype(jnp.bfloat16),
                    preferred_element_type=jnp.float32) + b11[i]

        y = _gelu(_layer_norm_channels(y, g2[i], be2[i]))

        x = x + y                             # dropout is identity (p = 0.0)

    o_ref[0] = (x * mask).astype(o_ref.dtype)


def ddsconv(x, x_mask, params, *, kernel_size, num_layers, g=None):
    """x: [B, C, T], x_mask: [B, 1, T]."""
    if g is not None:                         # optional conditioning (module's `g`)
        x = x + g
    B, C, T = x.shape

    ordered = [params[name] for name in PARAM_ORDER]
    kernel = functools.partial(ddsconv_kernel, kernel_size, num_layers)

    def const_spec(shape):                    # weights: resident, constant index_map
        nd = len(shape)
        return pl.BlockSpec(shape, lambda b, _nd=nd: (0,) * _nd)

    in_specs = [pl.BlockSpec((1, C, T), lambda b: (b, 0, 0)),
                pl.BlockSpec((1, 1, T), lambda b: (b, 0, 0))]
    in_specs += [const_spec(p.shape) for p in ordered]

    return pl.pallas_call(
        kernel,
        out_shape=jax.ShapeDtypeStruct((B, C, T), x.dtype),
        grid_spec=pltpu.PrefetchScalarGridSpec(
            num_scalar_prefetch=0,
            grid=(B,),
            in_specs=in_specs,
            out_specs=pl.BlockSpec((1, C, T), lambda b: (b, 0, 0)),
        ),
        compiler_params=pltpu.CompilerParams(
            dimension_semantics=("parallel",)),
    )(x, x_mask, *ordered)


def init_params(key, channels, kernel_size, num_layers):
    C, K, L = channels, kernel_size, num_layers
    ks = jax.random.split(key, 4)
    return {
        "w_sep": jax.random.normal(ks[0], (L, C, K), jnp.float32) / np.sqrt(K),
        "b_sep": 0.1 * jax.random.normal(ks[1], (L, C, 1), jnp.float32),
        "w_1x1": jax.random.normal(ks[2], (L, C, C), jnp.float32) / np.sqrt(C),
        "b_1x1": 0.1 * jax.random.normal(ks[3], (L, C, 1), jnp.float32),
        "g1": 0.1 * jnp.ones((L, C, 1), jnp.float32),   # LayerNorm2 gamma init = 0.1
        "beta1": jnp.zeros((L, C, 1), jnp.float32),
        "g2": 0.1 * jnp.ones((L, C, 1), jnp.float32),
        "beta2": jnp.zeros((L, C, 1), jnp.float32),
    }


# ----------------------------- NumPy reference -------------------------------

def _np_bf16_round(a):
    # Mirror the kernel's bf16 matmul-input rounding so the comparison is tight.
    return np.asarray(
        jnp.asarray(np.asarray(a, np.float32)).astype(jnp.bfloat16).astype(jnp.float32),
        np.float64)


def _np_gelu(x):
    a1, a2, a3, a4, a5 = 0.254829592, -0.284496736, 1.421413741, -1.453152027, 1.061405429
    p = 0.3275911
    z = x * _INV_SQRT2
    sign = np.where(z >= 0.0, 1.0, -1.0)
    za = np.abs(z)
    t = 1.0 / (1.0 + p * za)
    poly = t * (a1 + t * (a2 + t * (a3 + t * (a4 + t * a5))))
    erf = sign * (1.0 - poly * np.exp(-za * za))
    return 0.5 * x * (1.0 + erf)


def reference_numpy(x, x_mask, params, kernel_size, num_layers):
    """float64 NumPy reference of DilatedDepthSeparableConv.forward (eval mode)."""
    p = {k: np.asarray(v, np.float64) for k, v in params.items()}
    x = np.asarray(x, np.float64)
    mask = np.asarray(x_mask, np.float64)
    B, C, T = x.shape

    def ln(y, g, b, eps=1e-4):
        m = y.mean(axis=1, keepdims=True)
        v = ((y - m) ** 2).mean(axis=1, keepdims=True)
        return (y - m) / np.sqrt(v + eps) * g + b

    for i in range(num_layers):
        dil = kernel_size ** i
        pad = (kernel_size * dil - dil) // 2
        xm = x * mask
        xp = np.zeros((B, C, T + 2 * pad), np.float64)
        xp[:, :, pad:pad + T] = xm
        y = np.zeros((B, C, T), np.float64)
        for j in range(kernel_size):          # cross-correlation, same as nn.Conv1d
            y += p["w_sep"][i, :, j][None, :, None] * xp[:, :, j * dil:j * dil + T]
        y += p["b_sep"][i][None]
        y = _np_gelu(ln(y, p["g1"][i][None], p["beta1"][i][None]))
        wq = _np_bf16_round(p["w_1x1"][i])
        yq = _np_bf16_round(y)
        y = np.einsum("oc,bct->bot", wq, yq) + p["b_1x1"][i][None]
        y = _np_gelu(ln(y, p["g2"][i][None], p["beta2"][i][None]))
        x = x + y
    return x * mask


if __name__ == "__main__":
    B, C, T = 2, 4, 16
    KERNEL_SIZE, NUM_LAYERS = 3, 3

    key = jax.random.PRNGKey(0)
    kx, kp = jax.random.split(key)
    x = jax.random.normal(kx, (B, C, T), jnp.float32)
    lengths = np.array([T, T - 5])
    x_mask = jnp.asarray(
        (np.arange(T)[None, None, :] < lengths[:, None, None]).astype(np.float32))
    params = init_params(kp, C, KERNEL_SIZE, NUM_LAYERS)

    out = jax.block_until_ready(
        ddsconv(x, x_mask, params, kernel_size=KERNEL_SIZE, num_layers=NUM_LAYERS))

    ref = reference_numpy(np.asarray(x), np.asarray(x_mask),
                          {k: np.asarray(v) for k, v in params.items()},
                          KERNEL_SIZE, NUM_LAYERS)
    np.testing.assert_allclose(np.asarray(out), ref.astype(np.float32),
                               atol=5e-4, rtol=5e-4)
    print("KERNEL_OK")
</pallas_src>

<mosaic_0001>
module attributes {stable_mosaic.version = 11 : i64} {
  func.func @ddsconv_kernel(%arg0: i32, %arg1: memref<1x4x16xf32, #tpu.memory_space<vmem>>, %arg2: memref<1x1x16xf32, #tpu.memory_space<vmem>>, %arg3: memref<3x4x3xf32, #tpu.memory_space<vmem>>, %arg4: memref<3x4x1xf32, #tpu.memory_space<vmem>>, %arg5: memref<3x4x4xf32, #tpu.memory_space<vmem>>, %arg6: memref<3x4x1xf32, #tpu.memory_space<vmem>>, %arg7: memref<3x4x1xf32, #tpu.memory_space<vmem>>, %arg8: memref<3x4x1xf32, #tpu.memory_space<vmem>>, %arg9: memref<3x4x1xf32, #tpu.memory_space<vmem>>, %arg10: memref<3x4x1xf32, #tpu.memory_space<vmem>>, %arg11: memref<1x4x16xf32, #tpu.memory_space<vmem>>) attributes {dimension_semantics = [#tpu.dimension_semantics<parallel>], iteration_bounds = array<i64: 2>, scalar_prefetch = 0 : i64, scratch_operands = 0 : i64, tpu.core_type = #tpu.core_type<tc>, window_params = [{transform_indices = @transform_0, window_bounds = array<i64: 1, 4, 16>}, {transform_indices = @transform_1, window_bounds = array<i64: 1, 1, 16>}, {pipeline_mode = #tpu.pipeline_mode<synchronous>, transform_indices = @transform_2, window_bounds = array<i64: 3, 4, 3>}, {pipeline_mode = #tpu.pipeline_mode<synchronous>, transform_indices = @transform_3, window_bounds = array<i64: 3, 4, 1>}, {pipeline_mode = #tpu.pipeline_mode<synchronous>, transform_indices = @transform_4, window_bounds = array<i64: 3, 4, 4>}, {pipeline_mode = #tpu.pipeline_mode<synchronous>, transform_indices = @transform_5, window_bounds = array<i64: 3, 4, 1>}, {pipeline_mode = #tpu.pipeline_mode<synchronous>, transform_indices = @transform_6, window_bounds = array<i64: 3, 4, 1>}, {pipeline_mode = #tpu.pipeline_mode<synchronous>, transform_indices = @transform_7, window_bounds = array<i64: 3, 4, 1>}, {pipeline_mode = #tpu.pipeline_mode<synchronous>, transform_indices = @transform_8, window_bounds = array<i64: 3, 4, 1>}, {pipeline_mode = #tpu.pipeline_mode<synchronous>, transform_indices = @transform_9, window_bounds = array<i64: 3, 4, 1>}, {transform_indices = @transform_10, window_bounds = array<i64: 1, 4, 16>}]} {
    %c0 = arith.constant 0 : index
    %c0_0 = arith.constant 0 : index
    %c0_1 = arith.constant 0 : index
    %0 = vector.load %arg1[%c0, %c0_0, %c0_1] : memref<1x4x16xf32, #tpu.memory_space<vmem>>, vector<1x4x16xf32>
    %1 = vector.shape_cast %0 : vector<1x4x16xf32> to vector<4x16xf32>
    %c0_2 = arith.constant 0 : index
    %c0_3 = arith.constant 0 : index
    %c0_4 = arith.constant 0 : index
    %2 = vector.load %arg2[%c0_2, %c0_3, %c0_4] : memref<1x1x16xf32, #tpu.memory_space<vmem>>, vector<1x1x16xf32>
    %3 = vector.shape_cast %2 : vector<1x1x16xf32> to vector<1x16xf32>
    %c0_5 = arith.constant 0 : index
    %c0_6 = arith.constant 0 : index
    %c0_7 = arith.constant 0 : index
    %4 = vector.load %arg3[%c0_5, %c0_6, %c0_7] : memref<3x4x3xf32, #tpu.memory_space<vmem>>, vector<3x4x3xf32>
    %c0_8 = arith.constant 0 : index
    %c0_9 = arith.constant 0 : index
    %c0_10 = arith.constant 0 : index
    %5 = vector.load %arg4[%c0_8, %c0_9, %c0_10] : memref<3x4x1xf32, #tpu.memory_space<vmem>>, vector<3x4x1xf32>
    %c0_11 = arith.constant 0 : index
    %c0_12 = arith.constant 0 : index
    %c0_13 = arith.constant 0 : index
    %6 = vector.load %arg5[%c0_11, %c0_12, %c0_13] : memref<3x4x4xf32, #tpu.memory_space<vmem>>, vector<3x4x4xf32>
    %7 = arith.truncf %6 : vector<3x4x4xf32> to vector<3x4x4xbf16>
    %c0_14 = arith.constant 0 : index
    %c0_15 = arith.constant 0 : index
    %c0_16 = arith.constant 0 : index
    %8 = vector.load %arg6[%c0_14, %c0_15, %c0_16] : memref<3x4x1xf32, #tpu.memory_space<vmem>>, vector<3x4x1xf32>
    %c0_17 = arith.constant 0 : index
    %c0_18 = arith.constant 0 : index
    %c0_19 = arith.constant 0 : index
    %9 = vector.load %arg7[%c0_17, %c0_18, %c0_19] : memref<3x4x1xf32, #tpu.memory_space<vmem>>, vector<3x4x1xf32>
    %c0_20 = arith.constant 0 : index
    %c0_21 = arith.constant 0 : index
    %c0_22 = arith.constant 0 : index
    %10 = vector.load %arg8[%c0_20, %c0_21, %c0_22] : memref<3x4x1xf32, #tpu.memory_space<vmem>>, vector<3x4x1xf32>
    %c0_23 = arith.constant 0 : index
    %c0_24 = arith.constant 0 : index
    %c0_25 = arith.constant 0 : index
    %11 = vector.load %arg9[%c0_23, %c0_24, %c0_25] : memref<3x4x1xf32, #tpu.memory_space<vmem>>, vector<3x4x1xf32>
    %c0_26 = arith.constant 0 : index
    %c0_27 = arith.constant 0 : index
    %c0_28 = arith.constant 0 : index
    %12 = vector.load %arg10[%c0_26, %c0_27, %c0_28] : memref<3x4x1xf32, #tpu.memory_space<vmem>>, vector<3x4x1xf32>
    %13 = vector.broadcast %3 : vector<1x16xf32> to vector<4x16xf32>
    %14 = arith.mulf %1, %13 : vector<4x16xf32>
    %cst = arith.constant 0.000000e+00 : f32
    %15 = vector.broadcast %cst : f32 to vector<4x1xf32>
    %16 = tpu.concatenate %15, %14, %15 in 1 : vector<4x1xf32>, vector<4x16xf32>, vector<4x1xf32> -> vector<4x18xf32>
    %cst_29 = arith.constant 0.000000e+00 : f32
    %17 = vector.broadcast %cst_29 : f32 to vector<4x16xf32>
    %18 = vector.extract_strided_slice %4 {offsets = [0, 0, 0], sizes = [1, 4, 1], strides = [1, 1, 1]} : vector<3x4x3xf32> to vector<1x4x1xf32>
    %19 = vector.shape_cast %18 : vector<1x4x1xf32> to vector<4x1xf32>
    %20 = vector.extract_strided_slice %16 {offsets = [0, 0], sizes = [4, 16], strides = [1, 1]} : vector<4x18xf32> to vector<4x16xf32>
    %21 = vector.broadcast %19 : vector<4x1xf32> to vector<4x16xf32>
    %22 = arith.mulf %21, %20 : vector<4x16xf32>
    %23 = arith.addf %17, %22 : vector<4x16xf32>
    %24 = vector.extract_strided_slice %4 {offsets = [0, 0, 1], sizes = [1, 4, 1], strides = [1, 1, 1]} : vector<3x4x3xf32> to vector<1x4x1xf32>
    %25 = vector.shape_cast %24 : vector<1x4x1xf32> to vector<4x1xf32>
    %26 = vector.extract_strided_slice %16 {offsets = [0, 1], sizes = [4, 16], strides = [1, 1]} : vector<4x18xf32> to vector<4x16xf32>
    %27 = vector.broadcast %25 : vector<4x1xf32> to vector<4x16xf32>
    %28 = arith.mulf %27, %26 : vector<4x16xf32>
    %29 = arith.addf %23, %28 : vector<4x16xf32>
    %30 = vector.extract_strided_slice %4 {offsets = [0, 0, 2], sizes = [1, 4, 1], strides = [1, 1, 1]} : vector<3x4x3xf32> to vector<1x4x1xf32>
    %31 = vector.shape_cast %30 : vector<1x4x1xf32> to vector<4x1xf32>
    %32 = vector.extract_strided_slice %16 {offsets = [0, 2], sizes = [4, 16], strides = [1, 1]} : vector<4x18xf32> to vector<4x16xf32>
    %33 = vector.broadcast %31 : vector<4x1xf32> to vector<4x16xf32>
    %34 = arith.mulf %33, %32 : vector<4x16xf32>
    %35 = arith.addf %29, %34 : vector<4x16xf32>
    %36 = vector.extract_strided_slice %5 {offsets = [0, 0, 0], sizes = [1, 4, 1], strides = [1, 1, 1]} : vector<3x4x1xf32> to vector<1x4x1xf32>
    %37 = vector.shape_cast %36 : vector<1x4x1xf32> to vector<4x1xf32>
    %38 = vector.broadcast %37 : vector<4x1xf32> to vector<4x16xf32>
    %39 = arith.addf %35, %38 : vector<4x16xf32>
    %40 = vector.extract_strided_slice %9 {offsets = [0, 0, 0], sizes = [1, 4, 1], strides = [1, 1, 1]} : vector<3x4x1xf32> to vector<1x4x1xf32>
    %41 = vector.shape_cast %40 : vector<1x4x1xf32> to vector<4x1xf32>
    %42 = vector.extract_strided_slice %10 {offsets = [0, 0, 0], sizes = [1, 4, 1], strides = [1, 1, 1]} : vector<3x4x1xf32> to vector<1x4x1xf32>
    %43 = vector.shape_cast %42 : vector<1x4x1xf32> to vector<4x1xf32>
    %cst_30 = arith.constant dense<0.000000e+00> : vector<16xf32>
    %44 = vector.multi_reduction <add>, %39, %cst_30 [0] : vector<4x16xf32> to vector<16xf32>
    %45 = vector.shape_cast %44 : vector<16xf32> to vector<1x16xf32>
    %cst_31 = arith.constant 4.000000e+00 : f32
    %46 = vector.broadcast %cst_31 : f32 to vector<1x16xf32>
    %47 = arith.divf %45, %46 : vector<1x16xf32>
    %48 = vector.broadcast %47 : vector<1x16xf32> to vector<4x16xf32>
    %49 = arith.subf %39, %48 : vector<4x16xf32>
    %50 = arith.mulf %49, %49 : vector<4x16xf32>
    %cst_32 = arith.constant dense<0.000000e+00> : vector<16xf32>
    %51 = vector.multi_reduction <add>, %50, %cst_32 [0] : vector<4x16xf32> to vector<16xf32>
    %52 = vector.shape_cast %51 : vector<16xf32> to vector<1x16xf32>
    %cst_33 = arith.constant 4.000000e+00 : f32
    %53 = vector.broadcast %cst_33 : f32 to vector<1x16xf32>
    %54 = arith.divf %52, %53 : vector<1x16xf32>
    %55 = vector.broadcast %47 : vector<1x16xf32> to vector<4x16xf32>
    %56 = arith.subf %39, %55 : vector<4x16xf32>
    %cst_34 = arith.constant 9.99999974E-5 : f32
    %57 = vector.broadcast %cst_34 : f32 to vector<1x16xf32>
    %58 = arith.addf %54, %57 : vector<1x16xf32>
    %59 = math.rsqrt %58 : vector<1x16xf32>
    %60 = vector.broadcast %59 : vector<1x16xf32> to vector<4x16xf32>
    %61 = arith.mulf %56, %60 : vector<4x16xf32>
    %62 = vector.broadcast %41 : vector<4x1xf32> to vector<4x16xf32>
    %63 = arith.mulf %61, %62 : vector<4x16xf32>
    %64 = vector.broadcast %43 : vector<4x1xf32> to vector<4x16xf32>
    %65 = arith.addf %63, %64 : vector<4x16xf32>
    %cst_35 = arith.constant 5.000000e-01 : f32
    %66 = vector.broadcast %cst_35 : f32 to vector<4x16xf32>
    %67 = arith.mulf %66, %65 : vector<4x16xf32>
    %cst_36 = arith.constant 0.707106769 : f32
    %68 = vector.broadcast %cst_36 : f32 to vector<4x16xf32>
    %69 = arith.mulf %65, %68 : vector<4x16xf32>
    %cst_37 = arith.constant 0.000000e+00 : f32
    %70 = vector.broadcast %cst_37 : f32 to vector<4x16xf32>
    %71 = arith.cmpf oge, %69, %70 : vector<4x16xf32>
    %cst_38 = arith.constant 1.000000e+00 : f32
    %cst_39 = arith.constant -1.000000e+00 : f32
    %72 = vector.broadcast %cst_38 : f32 to vector<4x16xf32>
    %73 = vector.broadcast %cst_39 : f32 to vector<4x16xf32>
    %74 = arith.select %71, %72, %73 : vector<4x16xi1>, vector<4x16xf32>
    %75 = math.absf %69 : vector<4x16xf32>
    %cst_40 = arith.constant 0.327591091 : f32
    %76 = vector.broadcast %cst_40 : f32 to vector<4x16xf32>
    %77 = arith.mulf %76, %75 : vector<4x16xf32>
    %cst_41 = arith.constant 1.000000e+00 : f32
    %78 = vector.broadcast %cst_41 : f32 to vector<4x16xf32>
    %79 = arith.addf %78, %77 : vector<4x16xf32>
    %cst_42 = arith.constant 1.000000e+00 : f32
    %80 = vector.broadcast %cst_42 : f32 to vector<4x16xf32>
    %81 = arith.divf %80, %79 : vector<4x16xf32>
    %cst_43 = arith.constant 1.06140542 : f32
    %82 = vector.broadcast %cst_43 : f32 to vector<4x16xf32>
    %83 = arith.mulf %81, %82 : vector<4x16xf32>
    %cst_44 = arith.constant -1.45315206 : f32
    %84 = vector.broadcast %cst_44 : f32 to vector<4x16xf32>
    %85 = arith.addf %84, %83 : vector<4x16xf32>
    %86 = arith.mulf %81, %85 : vector<4x16xf32>
    %cst_45 = arith.constant 1.42141378 : f32
    %87 = vector.broadcast %cst_45 : f32 to vector<4x16xf32>
    %88 = arith.addf %87, %86 : vector<4x16xf32>
    %89 = arith.mulf %81, %88 : vector<4x16xf32>
    %cst_46 = arith.constant -0.284496725 : f32
    %90 = vector.broadcast %cst_46 : f32 to vector<4x16xf32>
    %91 = arith.addf %90, %89 : vector<4x16xf32>
    %92 = arith.mulf %81, %91 : vector<4x16xf32>
    %cst_47 = arith.constant 0.254829586 : f32
    %93 = vector.broadcast %cst_47 : f32 to vector<4x16xf32>
    %94 = arith.addf %93, %92 : vector<4x16xf32>
    %95 = arith.mulf %81, %94 : vector<4x16xf32>
    %cst_48 = arith.constant 0.000000e+00 : f32
    %96 = vector.broadcast %cst_48 : f32 to vector<4x16xf32>
    %97 = arith.subf %96, %75 : vector<4x16xf32>
    %98 = arith.mulf %97, %75 : vector<4x16xf32>
    %99 = math.exp %98 : vector<4x16xf32>
    %100 = arith.mulf %95, %99 : vector<4x16xf32>
    %cst_49 = arith.constant 1.000000e+00 : f32
    %101 = vector.broadcast %cst_49 : f32 to vector<4x16xf32>
    %102 = arith.subf %101, %100 : vector<4x16xf32>
    %103 = arith.mulf %74, %102 : vector<4x16xf32>
    %cst_50 = arith.constant 1.000000e+00 : f32
    %104 = vector.broadcast %cst_50 : f32 to vector<4x16xf32>
    %105 = arith.addf %104, %103 : vector<4x16xf32>
    %106 = arith.mulf %67, %105 : vector<4x16xf32>
    %107 = vector.extract_strided_slice %7 {offsets = [0, 0, 0], sizes = [1, 4, 4], strides = [1, 1, 1]} : vector<3x4x4xbf16> to vector<1x4x4xbf16>
    %108 = vector.shape_cast %107 : vector<1x4x4xbf16> to vector<4x4xbf16>
    %109 = arith.truncf %106 : vector<4x16xf32> to vector<4x16xbf16>
    %cst_51 = arith.constant dense<0.000000e+00> : vector<4x16xf32>
    %110 = tpu.matmul %108, %109, %cst_51 {dimension_numbers = #tpu.dot_dimension_numbers<[1], [0], [0], [1], [0, 0, 1, 1], [], []>} : vector<4x4xbf16>, vector<4x16xbf16>, vector<4x16xf32> -> vector<4x16xf32>
    %111 = vector.extract_strided_slice %8 {offsets = [0, 0, 0], sizes = [1, 4, 1], strides = [1, 1, 1]} : vector<3x4x1xf32> to vector<1x4x1xf32>
    %112 = vector.shape_cast %111 : vector<1x4x1xf32> to vector<4x1xf32>
    %113 = vector.broadcast %112 : vector<4x1xf32> to vector<4x16xf32>
    %114 = arith.addf %110, %113 : vector<4x16xf32>
    %115 = vector.extract_strided_slice %11 {offsets = [0, 0, 0], sizes = [1, 4, 1], strides = [1, 1, 1]} : vector<3x4x1xf32> to vector<1x4x1xf32>
    %116 = vector.shape_cast %115 : vector<1x4x1xf32> to vector<4x1xf32>
    %117 = vector.extract_strided_slice %12 {offsets = [0, 0, 0], sizes = [1, 4, 1], strides = [1, 1, 1]} : vector<3x4x1xf32> to vector<1x4x1xf32>
    %118 = vector.shape_cast %117 : vector<1x4x1xf32> to vector<4x1xf32>
    %cst_52 = arith.constant dense<0.000000e+00> : vector<16xf32>
    %119 = vector.multi_reduction <add>, %114, %cst_52 [0] : vector<4x16xf32> to vector<16xf32>
    %120 = vector.shape_cast %119 : vector<16xf32> to vector<1x16xf32>
    %cst_53 = arith.constant 4.000000e+00 : f32
    %121 = vector.broadcast %cst_53 : f32 to vector<1x16xf32>
    %122 = arith.divf %120, %121 : vector<1x16xf32>
    %123 = vector.broadcast %122 : vector<1x16xf32> to vector<4x16xf32>
    %124 = arith.subf %114, %123 : vector<4x16xf32>
    %125 = arith.mulf %124, %124 : vector<4x16xf32>
    %cst_54 = arith.constant dense<0.000000e+00> : vector<16xf32>
    %126 = vector.multi_reduction <add>, %125, %cst_54 [0] : vector<4x16xf32> to vector<16xf32>
    %127 = vector.shape_cast %126 : vector<16xf32> to vector<1x16xf32>
    %cst_55 = arith.constant 4.000000e+00 : f32
    %128 = vector.broadcast %cst_55 : f32 to vector<1x16xf32>
    %129 = arith.divf %127, %128 : vector<1x16xf32>
    %130 = vector.broadcast %122 : vector<1x16xf32> to vector<4x16xf32>
    %131 = arith.subf %114, %130 : vector<4x16xf32>
    %cst_56 = arith.constant 9.99999974E-5 : f32
    %132 = vector.broadcast %cst_56 : f32 to vector<1x16xf32>
    %133 = arith.addf %129, %132 : vector<1x16xf32>
    %134 = math.rsqrt %133 : vector<1x16xf32>
    %135 = vector.broadcast %134 : vector<1x16xf32> to vector<4x16xf32>
    %136 = arith.mulf %131, %135 : vector<4x16xf32>
    %137 = vector.broadcast %116 : vector<4x1xf32> to vector<4x16xf32>
    %138 = arith.mulf %136, %137 : vector<4x16xf32>
    %139 = vector.broadcast %118 : vector<4x1xf32> to vector<4x16xf32>
    %140 = arith.addf %138, %139 : vector<4x16xf32>
    %cst_57 = arith.constant 5.000000e-01 : f32
    %141 = vector.broadcast %cst_57 : f32 to vector<4x16xf32>
    %142 = arith.mulf %141, %140 : vector<4x16xf32>
    %cst_58 = arith.constant 0.707106769 : f32
    %143 = vector.broadcast %cst_58 : f32 to vector<4x16xf32>
    %144 = arith.mulf %140, %143 : vector<4x16xf32>
    %cst_59 = arith.constant 0.000000e+00 : f32
    %145 = vector.broadcast %cst_59 : f32 to vector<4x16xf32>
    %146 = arith.cmpf oge, %144, %145 : vector<4x16xf32>
    %cst_60 = arith.constant 1.000000e+00 : f32
    %cst_61 = arith.constant -1.000000e+00 : f32
    %147 = vector.broadcast %cst_60 : f32 to vector<4x16xf32>
    %148 = vector.broadcast %cst_61 : f32 to vector<4x16xf32>
    %149 = arith.select %146, %147, %148 : vector<4x16xi1>, vector<4x16xf32>
    %150 = math.absf %144 : vector<4x16xf32>
    %cst_62 = arith.constant 0.327591091 : f32
    %151 = vector.broadcast %cst_62 : f32 to vector<4x16xf32>
    %152 = arith.mulf %151, %150 : vector<4x16xf32>
    %cst_63 = arith.constant 1.000000e+00 : f32
    %153 = vector.broadcast %cst_63 : f32 to vector<4x16xf32>
    %154 = arith.addf %153, %152 : vector<4x16xf32>
    %cst_64 = arith.constant 1.000000e+00 : f32
    %155 = vector.broadcast %cst_64 : f32 to vector<4x16xf32>
    %156 = arith.divf %155, %154 : vector<4x16xf32>
    %cst_65 = arith.constant 1.06140542 : f32
    %157 = vector.broadcast %cst_65 : f32 to vector<4x16xf32>
    %158 = arith.mulf %156, %157 : vector<4x16xf32>
    %cst_66 = arith.constant -1.45315206 : f32
    %159 = vector.broadcast %cst_66 : f32 to vector<4x16xf32>
    %160 = arith.addf %159, %158 : vector<4x16xf32>
    %161 = arith.mulf %156, %160 : vector<4x16xf32>
    %cst_67 = arith.constant 1.42141378 : f32
    %162 = vector.broadcast %cst_67 : f32 to vector<4x16xf32>
    %163 = arith.addf %162, %161 : vector<4x16xf32>
    %164 = arith.mulf %156, %163 : vector<4x16xf32>
    %cst_68 = arith.constant -0.284496725 : f32
    %165 = vector.broadcast %cst_68 : f32 to vector<4x16xf32>
    %166 = arith.addf %165, %164 : vector<4x16xf32>
    %167 = arith.mulf %156, %166 : vector<4x16xf32>
    %cst_69 = arith.constant 0.254829586 : f32
    %168 = vector.broadcast %cst_69 : f32 to vector<4x16xf32>
    %169 = arith.addf %168, %167 : vector<4x16xf32>
    %170 = arith.mulf %156, %169 : vector<4x16xf32>
    %cst_70 = arith.constant 0.000000e+00 : f32
    %171 = vector.broadcast %cst_70 : f32 to vector<4x16xf32>
    %172 = arith.subf %171, %150 : vector<4x16xf32>
    %173 = arith.mulf %172, %150 : vector<4x16xf32>
    %174 = math.exp %173 : vector<4x16xf32>
    %175 = arith.mulf %170, %174 : vector<4x16xf32>
    %cst_71 = arith.constant 1.000000e+00 : f32
    %176 = vector.broadcast %cst_71 : f32 to vector<4x16xf32>
    %177 = arith.subf %176, %175 : vector<4x16xf32>
    %178 = arith.mulf %149, %177 : vector<4x16xf32>
    %cst_72 = arith.constant 1.000000e+00 : f32
    %179 = vector.broadcast %cst_72 : f32 to vector<4x16xf32>
    %180 = arith.addf %179, %178 : vector<4x16xf32>
    %181 = arith.mulf %142, %180 : vector<4x16xf32>
    %182 = arith.addf %1, %181 : vector<4x16xf32>
    %183 = vector.broadcast %3 : vector<1x16xf32> to vector<4x16xf32>
    %184 = arith.mulf %182, %183 : vector<4x16xf32>
    %cst_73 = arith.constant 0.000000e+00 : f32
    %185 = vector.broadcast %cst_73 : f32 to vector<4x3xf32>
    %186 = tpu.concatenate %185, %184, %185 in 1 : vector<4x3xf32>, vector<4x16xf32>, vector<4x3xf32> -> vector<4x22xf32>
    %cst_74 = arith.constant 0.000000e+00 : f32
    %187 = vector.broadcast %cst_74 : f32 to vector<4x16xf32>
    %188 = vector.extract_strided_slice %4 {offsets = [1, 0, 0], sizes = [1, 4, 1], strides = [1, 1, 1]} : vector<3x4x3xf32> to vector<1x4x1xf32>
    %189 = vector.shape_cast %188 : vector<1x4x1xf32> to vector<4x1xf32>
    %190 = vector.extract_strided_slice %186 {offsets = [0, 0], sizes = [4, 16], strides = [1, 1]} : vector<4x22xf32> to vector<4x16xf32>
    %191 = vector.broadcast %189 : vector<4x1xf32> to vector<4x16xf32>
    %192 = arith.mulf %191, %190 : vector<4x16xf32>
    %193 = arith.addf %187, %192 : vector<4x16xf32>
    %194 = vector.extract_strided_slice %4 {offsets = [1, 0, 1], sizes = [1, 4, 1], strides = [1, 1, 1]} : vector<3x4x3xf32> to vector<1x4x1xf32>
    %195 = vector.shape_cast %194 : vector<1x4x1xf32> to vector<4x1xf32>
    %196 = vector.extract_strided_slice %186 {offsets = [0, 3], sizes = [4, 16], strides = [1, 1]} : vector<4x22xf32> to vector<4x16xf32>
    %197 = vector.broadcast %195 : vector<4x1xf32> to vector<4x16xf32>
    %198 = arith.mulf %197, %196 : vector<4x16xf32>
    %199 = arith.addf %193, %198 : vector<4x16xf32>
    %200 = vector.extract_strided_slice %4 {offsets = [1, 0, 2], sizes = [1, 4, 1], strides = [1, 1, 1]} : vector<3x4x3xf32> to vector<1x4x1xf32>
    %201 = vector.shape_cast %200 : vector<1x4x1xf32> to vector<4x1xf32>
    %202 = vector.extract_strided_slice %186 {offsets = [0, 6], sizes = [4, 16], strides = [1, 1]} : vector<4x22xf32> to vector<4x16xf32>
    %203 = vector.broadcast %201 : vector<4x1xf32> to vector<4x16xf32>
    %204 = arith.mulf %203, %202 : vector<4x16xf32>
    %205 = arith.addf %199, %204 : vector<4x16xf32>
    %206 = vector.extract_strided_slice %5 {offsets = [1, 0, 0], sizes = [1, 4, 1], strides = [1, 1, 1]} : vector<3x4x1xf32> to vector<1x4x1xf32>
    %207 = vector.shape_cast %206 : vector<1x4x1xf32> to vector<4x1xf32>
    %208 = vector.broadcast %207 : vector<4x1xf32> to vector<4x16xf32>
    %209 = arith.addf %205, %208 : vector<4x16xf32>
    %210 = vector.extract_strided_slice %9 {offsets = [1, 0, 0], sizes = [1, 4, 1], strides = [1, 1, 1]} : vector<3x4x1xf32> to vector<1x4x1xf32>
    %211 = vector.shape_cast %210 : vector<1x4x1xf32> to vector<4x1xf32>
    %212 = vector.extract_strided_slice %10 {offsets = [1, 0, 0], sizes = [1, 4, 1], strides = [1, 1, 1]} : vector<3x4x1xf32> to vector<1x4x1xf32>
    %213 = vector.shape_cast %212 : vector<1x4x1xf32> to vector<4x1xf32>
    %cst_75 = arith.constant dense<0.000000e+00> : vector<16xf32>
    %214 = vector.multi_reduction <add>, %209, %cst_75 [0] : vector<4x16xf32> to vector<16xf32>
    %215 = vector.shape_cast %214 : vector<16xf32> to vector<1x16xf32>
    %cst_76 = arith.constant 4.000000e+00 : f32
    %216 = vector.broadcast %cst_76 : f32 to vector<1x16xf32>
    %217 = arith.divf %215, %216 : vector<1x16xf32>
    %218 = vector.broadcast %217 : vector<1x16xf32> to vector<4x16xf32>
    %219 = arith.subf %209, %218 : vector<4x16xf32>
    %220 = arith.mulf %219, %219 : vector<4x16xf32>
    %cst_77 = arith.constant dense<0.000000e+00> : vector<16xf32>
    %221 = vector.multi_reduction <add>, %220, %cst_77 [0] : vector<4x16xf32> to vector<16xf32>
    %222 = vector.shape_cast %221 : vector<16xf32> to vector<1x16xf32>
    %cst_78 = arith.constant 4.000000e+00 : f32
    %223 = vector.broadcast %cst_78 : f32 to vector<1x16xf32>
    %224 = arith.divf %222, %223 : vector<1x16xf32>
    %225 = vector.broadcast %217 : vector<1x16xf32> to vector<4x16xf32>
    %226 = arith.subf %209, %225 : vector<4x16xf32>
    %cst_79 = arith.constant 9.99999974E-5 : f32
    %227 = vector.broadcast %cst_79 : f32 to vector<1x16xf32>
    %228 = arith.addf %224, %227 : vector<1x16xf32>
    %229 = math.rsqrt %228 : vector<1x16xf32>
    %230 = vector.broadcast %229 : vector<1x16xf32> to vector<4x16xf32>
    %231 = arith.mulf %226, %230 : vector<4x16xf32>
    %232 = vector.broadcast %211 : vector<4x1xf32> to vector<4x16xf32>
    %233 = arith.mulf %231, %232 : vector<4x16xf32>
    %234 = vector.broadcast %213 : vector<4x1xf32> to vector<4x16xf32>
    %235 = arith.addf %233, %234 : vector<4x16xf32>
    %cst_80 = arith.constant 5.000000e-01 : f32
    %236 = vector.broadcast %cst_80 : f32 to vector<4x16xf32>
    %237 = arith.mulf %236, %235 : vector<4x16xf32>
    %cst_81 = arith.constant 0.707106769 : f32
    %238 = vector.broadcast %cst_81 : f32 to vector<4x16xf32>
    %239 = arith.mulf %235, %238 : vector<4x16xf32>
    %cst_82 = arith.constant 0.000000e+00 : f32
    %240 = vector.broadcast %cst_82 : f32 to vector<4x16xf32>
    %241 = arith.cmpf oge, %239, %240 : vector<4x16xf32>
    %cst_83 = arith.constant 1.000000e+00 : f32
    %cst_84 = arith.constant -1.000000e+00 : f32
    %242 = vector.broadcast %cst_83 : f32 to vector<4x16xf32>
    %243 = vector.broadcast %cst_84 : f32 to vector<4x16xf32>
    %244 = arith.select %241, %242, %243 : vector<4x16xi1>, vector<4x16xf32>
    %245 = math.absf %239 : vector<4x16xf32>
    %cst_85 = arith.constant 0.327591091 : f32
    %246 = vector.broadcast %cst_85 : f32 to vector<4x16xf32>
    %247 = arith.mulf %246, %245 : vector<4x16xf32>
    %cst_86 = arith.constant 1.000000e+00 : f32
    %248 = vector.broadcast %cst_86 : f32 to vector<4x16xf32>
    %249 = arith.addf %248, %247 : vector<4x16xf32>
    %cst_87 = arith.constant 1.000000e+00 : f32
    %250 = vector.broadcast %cst_87 : f32 to vector<4x16xf32>
    %251 = arith.divf %250, %249 : vector<4x16xf32>
    %cst_88 = arith.constant 1.06140542 : f32
    %252 = vector.broadcast %cst_88 : f32 to vector<4x16xf32>
    %253 = arith.mulf %251, %252 : vector<4x16xf32>
    %cst_89 = arith.constant -1.45315206 : f32
    %254 = vector.broadcast %cst_89 : f32 to vector<4x16xf32>
    %255 = arith.addf %254, %253 : vector<4x16xf32>
    %256 = arith.mulf %251, %255 : vector<4x16xf32>
    %cst_90 = arith.constant 1.42141378 : f32
    %257 = vector.broadcast %cst_90 : f32 to vector<4x16xf32>
    %258 = arith.addf %257, %256 : vector<4x16xf32>
    %259 = arith.mulf %251, %258 : vector<4x16xf32>
    %cst_91 = arith.constant -0.284496725 : f32
    %260 = vector.broadcast %cst_91 : f32 to vector<4x16xf32>
    %261 = arith.addf %260, %259 : vector<4x16xf32>
    %262 = arith.mulf %251, %261 : vector<4x16xf32>
    %cst_92 = arith.constant 0.254829586 : f32
    %263 = vector.broadcast %cst_92 : f32 to vector<4x16xf32>
    %264 = arith.addf %263, %262 : vector<4x16xf32>
    %265 = arith.mulf %251, %264 : vector<4x16xf32>
    %cst_93 = arith.constant 0.000000e+00 : f32
    %266 = vector.broadcast %cst_93 : f32 to vector<4x16xf32>
    %267 = arith.subf %266, %245 : vector<4x16xf32>
    %268 = arith.mulf %267, %245 : vector<4x16xf32>
    %269 = math.exp %268 : vector<4x16xf32>
    %270 = arith.mulf %265, %269 : vector<4x16xf32>
    %cst_94 = arith.constant 1.000000e+00 : f32
    %271 = vector.broadcast %cst_94 : f32 to vector<4x16xf32>
    %272 = arith.subf %271, %270 : vector<4x16xf32>
    %273 = arith.mulf %244, %272 : vector<4x16xf32>
    %cst_95 = arith.constant 1.000000e+00 : f32
    %274 = vector.broadcast %cst_95 : f32 to vector<4x16xf32>
    %275 = arith.addf %274, %273 : vector<4x16xf32>
    %276 = arith.mulf %237, %275 : vector<4x16xf32>
    %277 = vector.extract_strided_slice %7 {offsets = [1, 0, 0], sizes = [1, 4, 4], strides = [1, 1, 1]} : vector<3x4x4xbf16> to vector<1x4x4xbf16>
    %278 = vector.shape_cast %277 : vector<1x4x4xbf16> to vector<4x4xbf16>
    %279 = arith.truncf %276 : vector<4x16xf32> to vector<4x16xbf16>
    %cst_96 = arith.constant dense<0.000000e+00> : vector<4x16xf32>
    %280 = tpu.matmul %278, %279, %cst_96 {dimension_numbers = #tpu.dot_dimension_numbers<[1], [0], [0], [1], [0, 0, 1, 1], [], []>} : vector<4x4xbf16>, vector<4x16xbf16>, vector<4x16xf32> -> vector<4x16xf32>
    %281 = vector.extract_strided_slice %8 {offsets = [1, 0, 0], sizes = [1, 4, 1], strides = [1, 1, 1]} : vector<3x4x1xf32> to vector<1x4x1xf32>
    %282 = vector.shape_cast %281 : vector<1x4x1xf32> to vector<4x1xf32>
    %283 = vector.broadcast %282 : vector<4x1xf32> to vector<4x16xf32>
    %284 = arith.addf %280, %283 : vector<4x16xf32>
    %285 = vector.extract_strided_slice %11 {offsets = [1, 0, 0], sizes = [1, 4, 1], strides = [1, 1, 1]} : vector<3x4x1xf32> to vector<1x4x1xf32>
    %286 = vector.shape_cast %285 : vector<1x4x1xf32> to vector<4x1xf32>
    %287 = vector.extract_strided_slice %12 {offsets = [1, 0, 0], sizes = [1, 4, 1], strides = [1, 1, 1]} : vector<3x4x1xf32> to vector<1x4x1xf32>
    %288 = vector.shape_cast %287 : vector<1x4x1xf32> to vector<4x1xf32>
    %cst_97 = arith.constant dense<0.000000e+00> : vector<16xf32>
    %289 = vector.multi_reduction <add>, %284, %cst_97 [0] : vector<4x16xf32> to vector<16xf32>
    %290 = vector.shape_cast %289 : vector<16xf32> to vector<1x16xf32>
    %cst_98 = arith.constant 4.000000e+00 : f32
    %291 = vector.broadcast %cst_98 : f32 to vector<1x16xf32>
    %292 = arith.divf %290, %291 : vector<1x16xf32>
    %293 = vector.broadcast %292 : vector<1x16xf32> to vector<4x16xf32>
    %294 = arith.subf %284, %293 : vector<4x16xf32>
    %295 = arith.mulf %294, %294 : vector<4x16xf32>
    %cst_99 = arith.constant dense<0.000000e+00> : vector<16xf32>
    %296 = vector.multi_reduction <add>, %295, %cst_99 [0] : vector<4x16xf32> to vector<16xf32>
    %297 = vector.shape_cast %296 : vector<16xf32> to vector<1x16xf32>
    %cst_100 = arith.constant 4.000000e+00 : f32
    %298 = vector.broadcast %cst_100 : f32 to vector<1x16xf32>
    %299 = arith.divf %297, %298 : vector<1x16xf32>
    %300 = vector.broadcast %292 : vector<1x16xf32> to vector<4x16xf32>
    %301 = arith.subf %284, %300 : vector<4x16xf32>
    %cst_101 = arith.constant 9.99999974E-5 : f32
    %302 = vector.broadcast %cst_101 : f32 to vector<1x16xf32>
    %303 = arith.addf %299, %302 : vector<1x16xf32>
    %304 = math.rsqrt %303 : vector<1x16xf32>
    %305 = vector.broadcast %304 : vector<1x16xf32> to vector<4x16xf32>
    %306 = arith.mulf %301, %305 : vector<4x16xf32>
    %307 = vector.broadcast %286 : vector<4x1xf32> to vector<4x16xf32>
    %308 = arith.mulf %306, %307 : vector<4x16xf32>
    %309 = vector.broadcast %288 : vector<4x1xf32> to vector<4x16xf32>
    %310 = arith.addf %308, %309 : vector<4x16xf32>
    %cst_102 = arith.constant 5.000000e-01 : f32
    %311 = vector.broadcast %cst_102 : f32 to vector<4x16xf32>
    %312 = arith.mulf %311, %310 : vector<4x16xf32>
    %cst_103 = arith.constant 0.707106769 : f32
    %313 = vector.broadcast %cst_103 : f32 to vector<4x16xf32>
    %314 = arith.mulf %310, %313 : vector<4x16xf32>
    %cst_104 = arith.constant 0.000000e+00 : f32
    %315 = vector.broadcast %cst_104 : f32 to vector<4x16xf32>
    %316 = arith.cmpf oge, %314, %315 : vector<4x16xf32>
    %cst_105 = arith.constant 1.000000e+00 : f32
    %cst_106 = arith.constant -1.000000e+00 : f32
    %317 = vector.broadcast %cst_105 : f32 to vector<4x16xf32>
    %318 = vector.broadcast %cst_106 : f32 to vector<4x16xf32>
    %319 = arith.select %316, %317, %318 : vector<4x16xi1>, vector<4x16xf32>
    %320 = math.absf %314 : vector<4x16xf32>
    %cst_107 = arith.constant 0.327591091 : f32
    %321 = vector.broadcast %cst_107 : f32 to vector<4x16xf32>
    %322 = arith.mulf %321, %320 : vector<4x16xf32>
    %cst_108 = arith.constant 1.000000e+00 : f32
    %323 = vector.broadcast %cst_108 : f32 to vector<4x16xf32>
    %324 = arith.addf %323, %322 : vector<4x16xf32>
    %cst_109 = arith.constant 1.000000e+00 : f32
    %325 = vector.broadcast %cst_109 : f32 to vector<4x16xf32>
    %326 = arith.divf %325, %324 : vector<4x16xf32>
    %cst_110 = arith.constant 1.06140542 : f32
    %327 = vector.broadcast %cst_110 : f32 to vector<4x16xf32>
    %328 = arith.mulf %326, %327 : vector<4x16xf32>
    %cst_111 = arith.constant -1.45315206 : f32
    %329 = vector.broadcast %cst_111 : f32 to vector<4x16xf32>
    %330 = arith.addf %329, %328 : vector<4x16xf32>
    %331 = arith.mulf %326, %330 : vector<4x16xf32>
    %cst_112 = arith.constant 1.42141378 : f32
    %332 = vector.broadcast %cst_112 : f32 to vector<4x16xf32>
    %333 = arith.addf %332, %331 : vector<4x16xf32>
    %334 = arith.mulf %326, %333 : vector<4x16xf32>
    %cst_113 = arith.constant -0.284496725 : f32
    %335 = vector.broadcast %cst_113 : f32 to vector<4x16xf32>
    %336 = arith.addf %335, %334 : vector<4x16xf32>
    %337 = arith.mulf %326, %336 : vector<4x16xf32>
    %cst_114 = arith.constant 0.254829586 : f32
    %338 = vector.broadcast %cst_114 : f32 to vector<4x16xf32>
    %339 = arith.addf %338, %337 : vector<4x16xf32>
    %340 = arith.mulf %326, %339 : vector<4x16xf32>
    %cst_115 = arith.constant 0.000000e+00 : f32
    %341 = vector.broadcast %cst_115 : f32 to vector<4x16xf32>
    %342 = arith.subf %341, %320 : vector<4x16xf32>
    %343 = arith.mulf %342, %320 : vector<4x16xf32>
    %344 = math.exp %343 : vector<4x16xf32>
    %345 = arith.mulf %340, %344 : vector<4x16xf32>
    %cst_116 = arith.constant 1.000000e+00 : f32
    %346 = vector.broadcast %cst_116 : f32 to vector<4x16xf32>
    %347 = arith.subf %346, %345 : vector<4x16xf32>
    %348 = arith.mulf %319, %347 : vector<4x16xf32>
    %cst_117 = arith.constant 1.000000e+00 : f32
    %349 = vector.broadcast %cst_117 : f32 to vector<4x16xf32>
    %350 = arith.addf %349, %348 : vector<4x16xf32>
    %351 = arith.mulf %312, %350 : vector<4x16xf32>
    %352 = arith.addf %182, %351 : vector<4x16xf32>
    %353 = vector.broadcast %3 : vector<1x16xf32> to vector<4x16xf32>
    %354 = arith.mulf %352, %353 : vector<4x16xf32>
    %cst_118 = arith.constant 0.000000e+00 : f32
    %355 = vector.broadcast %cst_118 : f32 to vector<4x9xf32>
    %356 = tpu.concatenate %355, %354, %355 in 1 : vector<4x9xf32>, vector<4x16xf32>, vector<4x9xf32> -> vector<4x34xf32>
    %cst_119 = arith.constant 0.000000e+00 : f32
    %357 = vector.broadcast %cst_119 : f32 to vector<4x16xf32>
    %358 = vector.extract_strided_slice %4 {offsets = [2, 0, 0], sizes = [1, 4, 1], strides = [1, 1, 1]} : vector<3x4x3xf32> to vector<1x4x1xf32>
    %359 = vector.shape_cast %358 : vector<1x4x1xf32> to vector<4x1xf32>
    %360 = vector.extract_strided_slice %356 {offsets = [0, 0], sizes = [4, 16], strides = [1, 1]} : vector<4x34xf32> to vector<4x16xf32>
    %361 = vector.broadcast %359 : vector<4x1xf32> to vector<4x16xf32>
    %362 = arith.mulf %361, %360 : vector<4x16xf32>
    %363 = arith.addf %357, %362 : vector<4x16xf32>
    %364 = vector.extract_strided_slice %4 {offsets = [2, 0, 1], sizes = [1, 4, 1], strides = [1, 1, 1]} : vector<3x4x3xf32> to vector<1x4x1xf32>
    %365 = vector.shape_cast %364 : vector<1x4x1xf32> to vector<4x1xf32>
    %366 = vector.extract_strided_slice %356 {offsets = [0, 9], sizes = [4, 16], strides = [1, 1]} : vector<4x34xf32> to vector<4x16xf32>
    %367 = vector.broadcast %365 : vector<4x1xf32> to vector<4x16xf32>
    %368 = arith.mulf %367, %366 : vector<4x16xf32>
    %369 = arith.addf %363, %368 : vector<4x16xf32>
    %370 = vector.extract_strided_slice %4 {offsets = [2, 0, 2], sizes = [1, 4, 1], strides = [1, 1, 1]} : vector<3x4x3xf32> to vector<1x4x1xf32>
    %371 = vector.shape_cast %370 : vector<1x4x1xf32> to vector<4x1xf32>
    %372 = vector.extract_strided_slice %356 {offsets = [0, 18], sizes = [4, 16], strides = [1, 1]} : vector<4x34xf32> to vector<4x16xf32>
    %373 = vector.broadcast %371 : vector<4x1xf32> to vector<4x16xf32>
    %374 = arith.mulf %373, %372 : vector<4x16xf32>
    %375 = arith.addf %369, %374 : vector<4x16xf32>
    %376 = vector.extract_strided_slice %5 {offsets = [2, 0, 0], sizes = [1, 4, 1], strides = [1, 1, 1]} : vector<3x4x1xf32> to vector<1x4x1xf32>
    %377 = vector.shape_cast %376 : vector<1x4x1xf32> to vector<4x1xf32>
    %378 = vector.broadcast %377 : vector<4x1xf32> to vector<4x16xf32>
    %379 = arith.addf %375, %378 : vector<4x16xf32>
    %380 = vector.extract_strided_slice %9 {offsets = [2, 0, 0], sizes = [1, 4, 1], strides = [1, 1, 1]} : vector<3x4x1xf32> to vector<1x4x1xf32>
    %381 = vector.shape_cast %380 : vector<1x4x1xf32> to vector<4x1xf32>
    %382 = vector.extract_strided_slice %10 {offsets = [2, 0, 0], sizes = [1, 4, 1], strides = [1, 1, 1]} : vector<3x4x1xf32> to vector<1x4x1xf32>
    %383 = vector.shape_cast %382 : vector<1x4x1xf32> to vector<4x1xf32>
    %cst_120 = arith.constant dense<0.000000e+00> : vector<16xf32>
    %384 = vector.multi_reduction <add>, %379, %cst_120 [0] : vector<4x16xf32> to vector<16xf32>
    %385 = vector.shape_cast %384 : vector<16xf32> to vector<1x16xf32>
    %cst_121 = arith.constant 4.000000e+00 : f32
    %386 = vector.broadcast %cst_121 : f32 to vector<1x16xf32>
    %387 = arith.divf %385, %386 : vector<1x16xf32>
    %388 = vector.broadcast %387 : vector<1x16xf32> to vector<4x16xf32>
    %389 = arith.subf %379, %388 : vector<4x16xf32>
    %390 = arith.mulf %389, %389 : vector<4x16xf32>
    %cst_122 = arith.constant dense<0.000000e+00> : vector<16xf32>
    %391 = vector.multi_reduction <add>, %390, %cst_122 [0] : vector<4x16xf32> to vector<16xf32>
    %392 = vector.shape_cast %391 : vector<16xf32> to vector<1x16xf32>
    %cst_123 = arith.constant 4.000000e+00 : f32
    %393 = vector.broadcast %cst_123 : f32 to vector<1x16xf32>
    %394 = arith.divf %392, %393 : vector<1x16xf32>
    %395 = vector.broadcast %387 : vector<1x16xf32> to vector<4x16xf32>
    %396 = arith.subf %379, %395 : vector<4x16xf32>
    %cst_124 = arith.constant 9.99999974E-5 : f32
    %397 = vector.broadcast %cst_124 : f32 to vector<1x16xf32>
    %398 = arith.addf %394, %397 : vector<1x16xf32>
    %399 = math.rsqrt %398 : vector<1x16xf32>
    %400 = vector.broadcast %399 : vector<1x16xf32> to vector<4x16xf32>
    %401 = arith.mulf %396, %400 : vector<4x16xf32>
    %402 = vector.broadcast %381 : vector<4x1xf32> to vector<4x16xf32>
    %403 = arith.mulf %401, %402 : vector<4x16xf32>
    %404 = vector.broadcast %383 : vector<4x1xf32> to vector<4x16xf32>
    %405 = arith.addf %403, %404 : vector<4x16xf32>
    %cst_125 = arith.constant 5.000000e-01 : f32
    %406 = vector.broadcast %cst_125 : f32 to vector<4x16xf32>
    %407 = arith.mulf %406, %405 : vector<4x16xf32>
    %cst_126 = arith.constant 0.707106769 : f32
    %408 = vector.broadcast %cst_126 : f32 to vector<4x16xf32>
    %409 = arith.mulf %405, %408 : vector<4x16xf32>
    %cst_127 = arith.constant 0.000000e+00 : f32
    %410 = vector.broadcast %cst_127 : f32 to vector<4x16xf32>
    %411 = arith.cmpf oge, %409, %410 : vector<4x16xf32>
    %cst_128 = arith.constant 1.000000e+00 : f32
    %cst_129 = arith.constant -1.000000e+00 : f32
    %412 = vector.broadcast %cst_128 : f32 to vector<4x16xf32>
    %413 = vector.broadcast %cst_129 : f32 to vector<4x16xf32>
    %414 = arith.select %411, %412, %413 : vector<4x16xi1>, vector<4x16xf32>
    %415 = math.absf %409 : vector<4x16xf32>
    %cst_130 = arith.constant 0.327591091 : f32
    %416 = vector.broadcast %cst_130 : f32 to vector<4x16xf32>
    %417 = arith.mulf %416, %415 : vector<4x16xf32>
    %cst_131 = arith.constant 1.000000e+00 : f32
    %418 = vector.broadcast %cst_131 : f32 to vector<4x16xf32>
    %419 = arith.addf %418, %417 : vector<4x16xf32>
    %cst_132 = arith.constant 1.000000e+00 : f32
    %420 = vector.broadcast %cst_132 : f32 to vector<4x16xf32>
    %421 = arith.divf %420, %419 : vector<4x16xf32>
    %cst_133 = arith.constant 1.06140542 : f32
    %422 = vector.broadcast %cst_133 : f32 to vector<4x16xf32>
    %423 = arith.mulf %421, %422 : vector<4x16xf32>
    %cst_134 = arith.constant -1.45315206 : f32
    %424 = vector.broadcast %cst_134 : f32 to vector<4x16xf32>
    %425 = arith.addf %424, %423 : vector<4x16xf32>
    %426 = arith.mulf %421, %425 : vector<4x16xf32>
    %cst_135 = arith.constant 1.42141378 : f32
    %427 = vector.broadcast %cst_135 : f32 to vector<4x16xf32>
    %428 = arith.addf %427, %426 : vector<4x16xf32>
    %429 = arith.mulf %421, %428 : vector<4x16xf32>
    %cst_136 = arith.constant -0.284496725 : f32
    %430 = vector.broadcast %cst_136 : f32 to vector<4x16xf32>
    %431 = arith.addf %430, %429 : vector<4x16xf32>
    %432 = arith.mulf %421, %431 : vector<4x16xf32>
    %cst_137 = arith.constant 0.254829586 : f32
    %433 = vector.broadcast %cst_137 : f32 to vector<4x16xf32>
    %434 = arith.addf %433, %432 : vector<4x16xf32>
    %435 = arith.mulf %421, %434 : vector<4x16xf32>
    %cst_138 = arith.constant 0.000000e+00 : f32
    %436 = vector.broadcast %cst_138 : f32 to vector<4x16xf32>
    %437 = arith.subf %436, %415 : vector<4x16xf32>
    %438 = arith.mulf %437, %415 : vector<4x16xf32>
    %439 = math.exp %438 : vector<4x16xf32>
    %440 = arith.mulf %435, %439 : vector<4x16xf32>
    %cst_139 = arith.constant 1.000000e+00 : f32
    %441 = vector.broadcast %cst_139 : f32 to vector<4x16xf32>
    %442 = arith.subf %441, %440 : vector<4x16xf32>
    %443 = arith.mulf %414, %442 : vector<4x16xf32>
    %cst_140 = arith.constant 1.000000e+00 : f32
    %444 = vector.broadcast %cst_140 : f32 to vector<4x16xf32>
    %445 = arith.addf %444, %443 : vector<4x16xf32>
    %446 = arith.mulf %407, %445 : vector<4x16xf32>
    %447 = vector.extract_strided_slice %7 {offsets = [2, 0, 0], sizes = [1, 4, 4], strides = [1, 1, 1]} : vector<3x4x4xbf16> to vector<1x4x4xbf16>
    %448 = vector.shape_cast %447 : vector<1x4x4xbf16> to vector<4x4xbf16>
    %449 = arith.truncf %446 : vector<4x16xf32> to vector<4x16xbf16>
    %cst_141 = arith.constant dense<0.000000e+00> : vector<4x16xf32>
    %450 = tpu.matmul %448, %449, %cst_141 {dimension_numbers = #tpu.dot_dimension_numbers<[1], [0], [0], [1], [0, 0, 1, 1], [], []>} : vector<4x4xbf16>, vector<4x16xbf16>, vector<4x16xf32> -> vector<4x16xf32>
    %451 = vector.extract_strided_slice %8 {offsets = [2, 0, 0], sizes = [1, 4, 1], strides = [1, 1, 1]} : vector<3x4x1xf32> to vector<1x4x1xf32>
    %452 = vector.shape_cast %451 : vector<1x4x1xf32> to vector<4x1xf32>
    %453 = vector.broadcast %452 : vector<4x1xf32> to vector<4x16xf32>
    %454 = arith.addf %450, %453 : vector<4x16xf32>
    %455 = vector.extract_strided_slice %11 {offsets = [2, 0, 0], sizes = [1, 4, 1], strides = [1, 1, 1]} : vector<3x4x1xf32> to vector<1x4x1xf32>
    %456 = vector.shape_cast %455 : vector<1x4x1xf32> to vector<4x1xf32>
    %457 = vector.extract_strided_slice %12 {offsets = [2, 0, 0], sizes = [1, 4, 1], strides = [1, 1, 1]} : vector<3x4x1xf32> to vector<1x4x1xf32>
    %458 = vector.shape_cast %457 : vector<1x4x1xf32> to vector<4x1xf32>
    %cst_142 = arith.constant dense<0.000000e+00> : vector<16xf32>
    %459 = vector.multi_reduction <add>, %454, %cst_142 [0] : vector<4x16xf32> to vector<16xf32>
    %460 = vector.shape_cast %459 : vector<16xf32> to vector<1x16xf32>
    %cst_143 = arith.constant 4.000000e+00 : f32
    %461 = vector.broadcast %cst_143 : f32 to vector<1x16xf32>
    %462 = arith.divf %460, %461 : vector<1x16xf32>
    %463 = vector.broadcast %462 : vector<1x16xf32> to vector<4x16xf32>
    %464 = arith.subf %454, %463 : vector<4x16xf32>
    %465 = arith.mulf %464, %464 : vector<4x16xf32>
    %cst_144 = arith.constant dense<0.000000e+00> : vector<16xf32>
    %466 = vector.multi_reduction <add>, %465, %cst_144 [0] : vector<4x16xf32> to vector<16xf32>
    %467 = vector.shape_cast %466 : vector<16xf32> to vector<1x16xf32>
    %cst_145 = arith.constant 4.000000e+00 : f32
    %468 = vector.broadcast %cst_145 : f32 to vector<1x16xf32>
    %469 = arith.divf %467, %468 : vector<1x16xf32>
    %470 = vector.broadcast %462 : vector<1x16xf32> to vector<4x16xf32>
    %471 = arith.subf %454, %470 : vector<4x16xf32>
    %cst_146 = arith.constant 9.99999974E-5 : f32
    %472 = vector.broadcast %cst_146 : f32 to vector<1x16xf32>
    %473 = arith.addf %469, %472 : vector<1x16xf32>
    %474 = math.rsqrt %473 : vector<1x16xf32>
    %475 = vector.broadcast %474 : vector<1x16xf32> to vector<4x16xf32>
    %476 = arith.mulf %471, %475 : vector<4x16xf32>
    %477 = vector.broadcast %456 : vector<4x1xf32> to vector<4x16xf32>
    %478 = arith.mulf %476, %477 : vector<4x16xf32>
    %479 = vector.broadcast %458 : vector<4x1xf32> to vector<4x16xf32>
    %480 = arith.addf %478, %479 : vector<4x16xf32>
    %cst_147 = arith.constant 5.000000e-01 : f32
    %481 = vector.broadcast %cst_147 : f32 to vector<4x16xf32>
    %482 = arith.mulf %481, %480 : vector<4x16xf32>
    %cst_148 = arith.constant 0.707106769 : f32
    %483 = vector.broadcast %cst_148 : f32 to vector<4x16xf32>
    %484 = arith.mulf %480, %483 : vector<4x16xf32>
    %cst_149 = arith.constant 0.000000e+00 : f32
    %485 = vector.broadcast %cst_149 : f32 to vector<4x16xf32>
    %486 = arith.cmpf oge, %484, %485 : vector<4x16xf32>
    %cst_150 = arith.constant 1.000000e+00 : f32
    %cst_151 = arith.constant -1.000000e+00 : f32
    %487 = vector.broadcast %cst_150 : f32 to vector<4x16xf32>
    %488 = vector.broadcast %cst_151 : f32 to vector<4x16xf32>
    %489 = arith.select %486, %487, %488 : vector<4x16xi1>, vector<4x16xf32>
    %490 = math.absf %484 : vector<4x16xf32>
    %cst_152 = arith.constant 0.327591091 : f32
    %491 = vector.broadcast %cst_152 : f32 to vector<4x16xf32>
    %492 = arith.mulf %491, %490 : vector<4x16xf32>
    %cst_153 = arith.constant 1.000000e+00 : f32
    %493 = vector.broadcast %cst_153 : f32 to vector<4x16xf32>
    %494 = arith.addf %493, %492 : vector<4x16xf32>
    %cst_154 = arith.constant 1.000000e+00 : f32
    %495 = vector.broadcast %cst_154 : f32 to vector<4x16xf32>
    %496 = arith.divf %495, %494 : vector<4x16xf32>
    %cst_155 = arith.constant 1.06140542 : f32
    %497 = vector.broadcast %cst_155 : f32 to vector<4x16xf32>
    %498 = arith.mulf %496, %497 : vector<4x16xf32>
    %cst_156 = arith.constant -1.45315206 : f32
    %499 = vector.broadcast %cst_156 : f32 to vector<4x16xf32>
    %500 = arith.addf %499, %498 : vector<4x16xf32>
    %501 = arith.mulf %496, %500 : vector<4x16xf32>
    %cst_157 = arith.constant 1.42141378 : f32
    %502 = vector.broadcast %cst_157 : f32 to vector<4x16xf32>
    %503 = arith.addf %502, %501 : vector<4x16xf32>
    %504 = arith.mulf %496, %503 : vector<4x16xf32>
    %cst_158 = arith.constant -0.284496725 : f32
    %505 = vector.broadcast %cst_158 : f32 to vector<4x16xf32>
    %506 = arith.addf %505, %504 : vector<4x16xf32>
    %507 = arith.mulf %496, %506 : vector<4x16xf32>
    %cst_159 = arith.constant 0.254829586 : f32
    %508 = vector.broadcast %cst_159 : f32 to vector<4x16xf32>
    %509 = arith.addf %508, %507 : vector<4x16xf32>
    %510 = arith.mulf %496, %509 : vector<4x16xf32>
    %cst_160 = arith.constant 0.000000e+00 : f32
    %511 = vector.broadcast %cst_160 : f32 to vector<4x16xf32>
    %512 = arith.subf %511, %490 : vector<4x16xf32>
    %513 = arith.mulf %512, %490 : vector<4x16xf32>
    %514 = math.exp %513 : vector<4x16xf32>
    %515 = arith.mulf %510, %514 : vector<4x16xf32>
    %cst_161 = arith.constant 1.000000e+00 : f32
    %516 = vector.broadcast %cst_161 : f32 to vector<4x16xf32>
    %517 = arith.subf %516, %515 : vector<4x16xf32>
    %518 = arith.mulf %489, %517 : vector<4x16xf32>
    %cst_162 = arith.constant 1.000000e+00 : f32
    %519 = vector.broadcast %cst_162 : f32 to vector<4x16xf32>
    %520 = arith.addf %519, %518 : vector<4x16xf32>
    %521 = arith.mulf %482, %520 : vector<4x16xf32>
    %522 = arith.addf %352, %521 : vector<4x16xf32>
    %523 = vector.broadcast %3 : vector<1x16xf32> to vector<4x16xf32>
    %524 = arith.mulf %522, %523 : vector<4x16xf32>
    %c0_163 = arith.constant 0 : index
    %c0_164 = arith.constant 0 : index
    %c0_165 = arith.constant 0 : index
    %525 = vector.load %arg11[%c0_163, %c0_164, %c0_165] : memref<1x4x16xf32, #tpu.memory_space<vmem>>, vector<1x4x16xf32>
    %526 = vector.shape_cast %525 : vector<1x4x16xf32> to vector<4x16xf32>
    %527 = vector.shape_cast %524 : vector<4x16xf32> to vector<1x4x16xf32>
    tpu.vector_store %arg11[%c0_163, %c0_164, %c0_165], %527 {strides = array<i32>} : memref<1x4x16xf32, #tpu.memory_space<vmem>>, vector<1x4x16xf32>,
    return
  }
  func.func @transform_0(%arg0: i32) -> (i32, i32, i32) {
    %c0_i32 = arith.constant 0 : i32
    %c0_i32_0 = arith.constant 0 : i32
    %c0_i32_1 = arith.constant 0 : i32
    return %arg0, %c0_i32, %c0_i32_0 : i32, i32, i32
  }
  func.func @transform_1(%arg0: i32) -> (i32, i32, i32) {
    %c0_i32 = arith.constant 0 : i32
    %c0_i32_0 = arith.constant 0 : i32
    %c0_i32_1 = arith.constant 0 : i32
    return %arg0, %c0_i32, %c0_i32_0 : i32, i32, i32
  }
  func.func @transform_2(%arg0: i32) -> (i32, i32, i32) {
    %c0_i32 = arith.constant 0 : i32
    %c0_i32_0 = arith.constant 0 : i32
    %c0_i32_1 = arith.constant 0 : i32
    %c0_i32_2 = arith.constant 0 : i32
    return %c0_i32, %c0_i32_0, %c0_i32_1 : i32, i32, i32
  }
  func.func @transform_3(%arg0: i32) -> (i32, i32, i32) {
    %c0_i32 = arith.constant 0 : i32
    %c0_i32_0 = arith.constant 0 : i32
    %c0_i32_1 = arith.constant 0 : i32
    %c0_i32_2 = arith.constant 0 : i32
    return %c0_i32, %c0_i32_0, %c0_i32_1 : i32, i32, i32
  }
  func.func @transform_4(%arg0: i32) -> (i32, i32, i32) {
    %c0_i32 = arith.constant 0 : i32
    %c0_i32_0 = arith.constant 0 : i32
    %c0_i32_1 = arith.constant 0 : i32
    %c0_i32_2 = arith.constant 0 : i32
    return %c0_i32, %c0_i32_0, %c0_i32_1 : i32, i32, i32
  }
  func.func @transform_5(%arg0: i32) -> (i32, i32, i32) {
    %c0_i32 = arith.constant 0 : i32
    %c0_i32_0 = arith.constant 0 : i32
    %c0_i32_1 = arith.constant 0 : i32
    %c0_i32_2 = arith.constant 0 : i32
    return %c0_i32, %c0_i32_0, %c0_i32_1 : i32, i32, i32
  }
  func.func @transform_6(%arg0: i32) -> (i32, i32, i32) {
    %c0_i32 = arith.constant 0 : i32
    %c0_i32_0 = arith.constant 0 : i32
    %c0_i32_1 = arith.constant 0 : i32
    %c0_i32_2 = arith.constant 0 : i32
    return %c0_i32, %c0_i32_0, %c0_i32_1 : i32, i32, i32
  }
  func.func @transform_7(%arg0: i32) -> (i32, i32, i32) {
    %c0_i32 = arith.constant 0 : i32
    %c0_i32_0 = arith.constant 0 : i32
    %c0_i32_1 = arith.constant 0 : i32
    %c0_i32_2 = arith.constant 0 : i32
    return %c0_i32, %c0_i32_0, %c0_i32_1 : i32, i32, i32
  }
  func.func @transform_8(%arg0: i32) -> (i32, i32, i32) {
    %c0_i32 = arith.constant 0 : i32
    %c0_i32_0 = arith.constant 0 : i32
    %c0_i32_1 = arith.constant 0 : i32
    %c0_i32_2 = arith.constant 0 : i32
    return %c0_i32, %c0_i32_0, %c0_i32_1 : i32, i32, i32
  }
  func.func @transform_9(%arg0: i32) -> (i32, i32, i32) {
    %c0_i32 = arith.constant 0 : i32
    %c0_i32_0 = arith.constant 0 : i32
    %c0_i32_1 = arith.constant 0 : i32
    %c0_i32_2 = arith.constant 0 : i32
    return %c0_i32, %c0_i32_0, %c0_i32_1 : i32, i32, i32
  }
  func.func @transform_10(%arg0: i32) -> (i32, i32, i32) {
    %c0_i32 = arith.constant 0 : i32
    %c0_i32_0 = arith.constant 0 : i32
    %c0_i32_1 = arith.constant 0 : i32
    return %arg0, %c0_i32, %c0_i32_0 : i32, i32, i32
  }
}

</mosaic_0001>

<llo_original>
// kernel: tpu_custom_call.1
$region0: #{tpu_custom_call.1}
  #allocation0 [shape = 'u32[]', space=smem, size = 0x4, offset = 0x4, fixed_abs, tag = 'smem constant byte address 0x4 - core index']
  #allocation1 [shape = 'u32[144,128]{1,0:T(1,128)}', space=vmem, size = 0x12000, scoped, tag = 'internal scratch']
  %s0 = inlined_call_operand.vmem [shape: f32[2,4,16], index: 0, kind: input, shape index: {}]
  %s1 = inlined_call_operand.vmem [shape: f32[2,1,16], index: 1, kind: input, shape index: {}]
  %s2 = inlined_call_operand.vmem [shape: f32[3,4,3], index: 2, kind: input, shape index: {}]
  %s3 = inlined_call_operand.vmem [shape: f32[3,4,1], index: 3, kind: input, shape index: {}]
  %s4 = inlined_call_operand.vmem [shape: f32[3,4,4], index: 4, kind: input, shape index: {}]
  %s5 = inlined_call_operand.vmem [shape: f32[3,4,1], index: 5, kind: input, shape index: {}]
  %s6 = inlined_call_operand.vmem [shape: f32[3,4,1], index: 6, kind: input, shape index: {}]
  %s7 = inlined_call_operand.vmem [shape: f32[3,4,1], index: 7, kind: input, shape index: {}]
  %s8 = inlined_call_operand.vmem [shape: f32[3,4,1], index: 8, kind: input, shape index: {}]
  %s9 = inlined_call_operand.vmem [shape: f32[3,4,1], index: 9, kind: input, shape index: {}]
  %s10 = inlined_call_operand.hbm [shape: f32[2,4,16], index: 10, kind: output, shape index: {}]
  %s11 = sld [smem:[#allocation0]]
  $region73: #{tpu_custom_call.1} parent=0
    _
  %s13 = ssub.s32 1, %s11
  %s14 = scalar_select 0, %s13, %s11
  $region1: #{tpu_custom_call.1} parent=0
    #allocation2 [shape = 'u8[4096]{0}', space=vmem, size = 0x1000, scoped, tag = 'output window, operand 0']
    #allocation3 [shape = 's32[2]{0}', space=sflag, size = 0x8, scoped, tag = 'scoped memory for tpu_custom_call.1']
    %15 = vsyncpa [#allocation3], 0
    %s16 = scalar_lea.sflag [#allocation3], 1
    %17 = vsyncpa %s16, 0
    loop: start=0, step=1, limit=4
    $region2: #{tpu_custom_call.1} parent=1 // loop_pre_header
      _
    $region3: #{tpu_custom_call.1} parent=1 // loop_header
      %s19 = sphi 0, %s23
      %p20 = scmp.ge.s32.totalorder %s19, 4
      %s29 = sphi 0, %s31
      %s32 = sphi 0, %s29
      %s33 = sphi 0, %s32
      %s49 = sphi 0, %s33
      %s55 = sphi 0, %s57
      %s58 = sphi 0, %s55
      %s59 = sphi 0, %s58
      %s75 = sphi 0, %s59
      %s79 = sphi 0, %s79
      %s81 = sphi 0, %s79
      %s82 = sphi 0, %s81
      %s96 = sphi 0, %s82
      %s100 = sphi 0, %s100
      %s102 = sphi 0, %s100
      %s103 = sphi 0, %s102
      %s117 = sphi 0, %s103
      %s121 = sphi 0, %s121
      %s123 = sphi 0, %s121
      %s124 = sphi 0, %s123
      %s138 = sphi 0, %s124
      %s142 = sphi 0, %s142
      %s144 = sphi 0, %s142
      %s145 = sphi 0, %s144
      %s159 = sphi 0, %s145
      %s163 = sphi 0, %s163
      %s165 = sphi 0, %s163
      %s166 = sphi 0, %s165
      %s180 = sphi 0, %s166
      %s184 = sphi 0, %s184
      %s186 = sphi 0, %s184
      %s187 = sphi 0, %s186
      %s201 = sphi 0, %s187
      %s205 = sphi 0, %s205
      %s207 = sphi 0, %s205
      %s208 = sphi 0, %s207
      %s222 = sphi 0, %s208
      %s226 = sphi 0, %s226
      %s228 = sphi 0, %s226
      %s229 = sphi 0, %s228
      %s243 = sphi 0, %s229
      %s249 = sphi 0, %s251
      %s252 = sphi 0, %s249
      %s253 = sphi 0, %s252
      %s269 = sphi 0, %s253
    $region4: #{tpu_custom_call.1} parent=1 // loop_header_branch
      %22 = sbr.rel (%p20) target = $region8
    $region5: #{tpu_custom_call.1} parent=1 // loop_body
      %s24 = ssub.s32 %s19, 1
      %s25 = ssub.s32 %s19, 2
      %s26 = sadd.s32 %s19, 1
      %s27 = ssub.s32 %s19, %s26
      %p28 = scmp.eq.s32.totalorder %s27, 0
      %s30 = sadd.s32 %s29, 1
      %s31 = scalar_select %p28, %s29, %s30
      %p34 = pneg %p28
      %p35 = scmp.eq.s32.totalorder %s19, 1
      %p36 = por %p34, %p35
      %p37 = scmp.ne.s32.totalorder %s29, %s32
      %p38 = scmp.eq.s32.totalorder %s19, 0
      %p39 = por %p37, %p38
      %p40 = scmp.ne.s32.totalorder %s29, %s32
      %p41 = scmp.eq.s32.totalorder %s24, 1
      %p42 = por %p40, %p41
      %p43 = scmp.ne.s32.totalorder %s32, %s33
      %p44 = scmp.eq.s32.totalorder %s24, 0
      %p45 = por %p43, %p44
      %p46 = scmp.ne.s32.totalorder %s32, %s33
      %p47 = scmp.eq.s32.totalorder %s25, 1
      %p48 = por %p46, %p47
      %p50 = scmp.ne.s32.totalorder %s33, %s49
      %p51 = scmp.eq.s32.totalorder %s25, 0
      %p52 = por %p50, %p51
      %s53 = ssub.s32 %s19, %s26
      %p54 = scmp.eq.s32.totalorder %s53, 0
      %s56 = sadd.s32 %s55, 1
      %s57 = scalar_select %p54, %s55, %s56
      %p60 = pneg %p54
      %p61 = scmp.eq.s32.totalorder %s19, 1
      %p62 = por %p60, %p61
      %p63 = scmp.ne.s32.totalorder %s55, %s58
      %p64 = scmp.eq.s32.totalorder %s19, 0
      %p65 = por %p63, %p64
      %p66 = scmp.ne.s32.totalorder %s55, %s58
      %p67 = scmp.eq.s32.totalorder %s24, 1
      %p68 = por %p66, %p67
      %p69 = scmp.ne.s32.totalorder %s58, %s59
      %p70 = scmp.eq.s32.totalorder %s24, 0
      %p71 = por %p69, %p70
      %p72 = scmp.ne.s32.totalorder %s58, %s59
      %p73 = scmp.eq.s32.totalorder %s25, 1
      %p74 = por %p72, %p73
      %p76 = scmp.ne.s32.totalorder %s59, %s75
      %p77 = scmp.eq.s32.totalorder %s25, 0
      %p78 = por %p76, %p77
      %s80 = sadd.s32 %s79, 1
      %p83 = scmp.eq.s32.totalorder %s19, 1
      %p84 = scmp.ne.s32.totalorder %s79, %s81
      %p85 = scmp.eq.s32.totalorder %s19, 0
      %p86 = por %p84, %p85
      %p87 = scmp.ne.s32.totalorder %s79, %s81
      %p88 = scmp.eq.s32.totalorder %s24, 1
      %p89 = por %p87, %p88
      %p90 = scmp.ne.s32.totalorder %s81, %s82
      %p91 = scmp.eq.s32.totalorder %s24, 0
      %p92 = por %p90, %p91
      %p93 = scmp.ne.s32.totalorder %s81, %s82
      %p94 = scmp.eq.s32.totalorder %s25, 1
      %p95 = por %p93, %p94
      %p97 = scmp.ne.s32.totalorder %s82, %s96
      %p98 = scmp.eq.s32.totalorder %s25, 0
      %p99 = por %p97, %p98
      %s101 = sadd.s32 %s100, 1
      %p104 = scmp.eq.s32.totalorder %s19, 1
      %p105 = scmp.ne.s32.totalorder %s100, %s102
      %p106 = scmp.eq.s32.totalorder %s19, 0
      %p107 = por %p105, %p106
      %p108 = scmp.ne.s32.totalorder %s100, %s102
      %p109 = scmp.eq.s32.totalorder %s24, 1
      %p110 = por %p108, %p109
      %p111 = scmp.ne.s32.totalorder %s102, %s103
      %p112 = scmp.eq.s32.totalorder %s24, 0
      %p113 = por %p111, %p112
      %p114 = scmp.ne.s32.totalorder %s102, %s103
      %p115 = scmp.eq.s32.totalorder %s25, 1
      %p116 = por %p114, %p115
      %p118 = scmp.ne.s32.totalorder %s103, %s117
      %p119 = scmp.eq.s32.totalorder %s25, 0
      %p120 = por %p118, %p119
      %s122 = sadd.s32 %s121, 1
      %p125 = scmp.eq.s32.totalorder %s19, 1
      %p126 = scmp.ne.s32.totalorder %s121, %s123
      %p127 = scmp.eq.s32.totalorder %s19, 0
      %p128 = por %p126, %p127
      %p129 = scmp.ne.s32.totalorder %s121, %s123
      %p130 = scmp.eq.s32.totalorder %s24, 1
      %p131 = por %p129, %p130
      %p132 = scmp.ne.s32.totalorder %s123, %s124
      %p133 = scmp.eq.s32.totalorder %s24, 0
      %p134 = por %p132, %p133
      %p135 = scmp.ne.s32.totalorder %s123, %s124
      %p136 = scmp.eq.s32.totalorder %s25, 1
      %p137 = por %p135, %p136
      %p139 = scmp.ne.s32.totalorder %s124, %s138
      %p140 = scmp.eq.s32.totalorder %s25, 0
      %p141 = por %p139, %p140
      %s143 = sadd.s32 %s142, 1
      %p146 = scmp.eq.s32.totalorder %s19, 1
      %p147 = scmp.ne.s32.totalorder %s142, %s144
      %p148 = scmp.eq.s32.totalorder %s19, 0
      %p149 = por %p147, %p148
      %p150 = scmp.ne.s32.totalorder %s142, %s144
      %p151 = scmp.eq.s32.totalorder %s24, 1
      %p152 = por %p150, %p151
      %p153 = scmp.ne.s32.totalorder %s144, %s145
      %p154 = scmp.eq.s32.totalorder %s24, 0
      %p155 = por %p153, %p154
      %p156 = scmp.ne.s32.totalorder %s144, %s145
      %p157 = scmp.eq.s32.totalorder %s25, 1
      %p158 = por %p156, %p157
      %p160 = scmp.ne.s32.totalorder %s145, %s159
      %p161 = scmp.eq.s32.totalorder %s25, 0
      %p162 = por %p160, %p161
      %s164 = sadd.s32 %s163, 1
      %p167 = scmp.eq.s32.totalorder %s19, 1
      %p168 = scmp.ne.s32.totalorder %s163, %s165
      %p169 = scmp.eq.s32.totalorder %s19, 0
      %p170 = por %p168, %p169
      %p171 = scmp.ne.s32.totalorder %s163, %s165
      %p172 = scmp.eq.s32.totalorder %s24, 1
      %p173 = por %p171, %p172
      %p174 = scmp.ne.s32.totalorder %s165, %s166
      %p175 = scmp.eq.s32.totalorder %s24, 0
      %p176 = por %p174, %p175
      %p177 = scmp.ne.s32.totalorder %s165, %s166
      %p178 = scmp.eq.s32.totalorder %s25, 1
      %p179 = por %p177, %p178
      %p181 = scmp.ne.s32.totalorder %s166, %s180
      %p182 = scmp.eq.s32.totalorder %s25, 0
      %p183 = por %p181, %p182
      %s185 = sadd.s32 %s184, 1
      %p188 = scmp.eq.s32.totalorder %s19, 1
      %p189 = scmp.ne.s32.totalorder %s184, %s186
      %p190 = scmp.eq.s32.totalorder %s19, 0
      %p191 = por %p189, %p190
      %p192 = scmp.ne.s32.totalorder %s184, %s186
      %p193 = scmp.eq.s32.totalorder %s24, 1
      %p194 = por %p192, %p193
      %p195 = scmp.ne.s32.totalorder %s186, %s187
      %p196 = scmp.eq.s32.totalorder %s24, 0
      %p197 = por %p195, %p196
      %p198 = scmp.ne.s32.totalorder %s186, %s187
      %p199 = scmp.eq.s32.totalorder %s25, 1
      %p200 = por %p198, %p199
      %p202 = scmp.ne.s32.totalorder %s187, %s201
      %p203 = scmp.eq.s32.totalorder %s25, 0
      %p204 = por %p202, %p203
      %s206 = sadd.s32 %s205, 1
      %p209 = scmp.eq.s32.totalorder %s19, 1
      %p210 = scmp.ne.s32.totalorder %s205, %s207
      %p211 = scmp.eq.s32.totalorder %s19, 0
      %p212 = por %p210, %p211
      %p213 = scmp.ne.s32.totalorder %s205, %s207
      %p214 = scmp.eq.s32.totalorder %s24, 1
      %p215 = por %p213, %p214
      %p216 = scmp.ne.s32.totalorder %s207, %s208
      %p217 = scmp.eq.s32.totalorder %s24, 0
      %p218 = por %p216, %p217
      %p219 = scmp.ne.s32.totalorder %s207, %s208
      %p220 = scmp.eq.s32.totalorder %s25, 1
      %p221 = por %p219, %p220
      %p223 = scmp.ne.s32.totalorder %s208, %s222
      %p224 = scmp.eq.s32.totalorder %s25, 0
      %p225 = por %p223, %p224
      %s227 = sadd.s32 %s226, 1
      %p230 = scmp.eq.s32.totalorder %s19, 1
      %p231 = scmp.ne.s32.totalorder %s226, %s228
      %p232 = scmp.eq.s32.totalorder %s19, 0
      %p233 = por %p231, %p232
      %p234 = scmp.ne.s32.totalorder %s226, %s228
      %p235 = scmp.eq.s32.totalorder %s24, 1
      %p236 = por %p234, %p235
      %p237 = scmp.ne.s32.totalorder %s228, %s229
      %p238 = scmp.eq.s32.totalorder %s24, 0
      %p239 = por %p237, %p238
      %p240 = scmp.ne.s32.totalorder %s228, %s229
      %p241 = scmp.eq.s32.totalorder %s25, 1
      %p242 = por %p240, %p241
      %p244 = scmp.ne.s32.totalorder %s229, %s243
      %p245 = scmp.eq.s32.totalorder %s25, 0
      %p246 = por %p244, %p245
      %s247 = ssub.s32 %s19, %s26
      %p248 = scmp.eq.s32.totalorder %s247, 0
      %s250 = sadd.s32 %s249, 1
      %s251 = scalar_select %p248, %s249, %s250
      %p254 = pneg %p248
      %p255 = scmp.eq.s32.totalorder %s19, 1
      %p256 = por %p254, %p255
      %p257 = scmp.ne.s32.totalorder %s249, %s252
      %p258 = scmp.eq.s32.totalorder %s19, 0
      %p259 = por %p257, %p258
      %p260 = scmp.ne.s32.totalorder %s249, %s252
      %p261 = scmp.eq.s32.totalorder %s24, 1
      %p262 = por %p260, %p261
      %p263 = scmp.ne.s32.totalorder %s252, %s253
      %p264 = scmp.eq.s32.totalorder %s24, 0
      %p265 = por %p263, %p264
      %p266 = scmp.ne.s32.totalorder %s252, %s253
      %p267 = scmp.eq.s32.totalorder %s25, 1
      %p268 = por %p266, %p267
      %p270 = scmp.ne.s32.totalorder %s253, %s269
      %p271 = scmp.eq.s32.totalorder %s25, 0
      %p272 = por %p270, %p271
      %p273 = scmp.le.s32.totalorder 1, %s19
      %p274 = scmp.lt.s32.totalorder %s19, 3
      %p275 = pnand %p273, %p274
      %p276 = pneg %p275
      // Predicated region
      $region9: #{tpu_custom_call.1} parent=5 // pred_check
        _
      $region10: #{tpu_custom_call.1} parent=5 // pred_check_branch
        %278 = sbr.rel (%p275) target = $region12
      $region11: #{tpu_custom_call.1} parent=5 // pred_region
        %s279 = ssub.s32 %s19, 1
        // Predicated region
        $region13: #{tpu_custom_call.1} parent=11 // pred_check
          %p280 = pneg %p92
        $region14: #{tpu_custom_call.1} parent=11 // pred_check_branch
          %282 = sbr.rel (%p280) target = $region16
        $region15: #{tpu_custom_call.1} parent=11 // pred_region
          _
        $region16: #{tpu_custom_call.1} parent=11 // pred_fallthru
          _
        // Predicated region
        $region17: #{tpu_custom_call.1} parent=11 // pred_check
          %p283 = pneg %p113
        $region18: #{tpu_custom_call.1} parent=11 // pred_check_branch
          %285 = sbr.rel (%p283) target = $region20
        $region19: #{tpu_custom_call.1} parent=11 // pred_region
          _
        $region20: #{tpu_custom_call.1} parent=11 // pred_fallthru
          _
        // Predicated region
        $region21: #{tpu_custom_call.1} parent=11 // pred_check
          %p286 = pneg %p134
        $region22: #{tpu_custom_call.1} parent=11 // pred_check_branch
          %288 = sbr.rel (%p286) target = $region24
        $region23: #{tpu_custom_call.1} parent=11 // pred_region
          _
        $region24: #{tpu_custom_call.1} parent=11 // pred_fallthru
          _
        // Predicated region
        $region25: #{tpu_custom_call.1} parent=11 // pred_check
          %p289 = pneg %p155
        $region26: #{tpu_custom_call.1} parent=11 // pred_check_branch
          %291 = sbr.rel (%p289) target = $region28
        $region27: #{tpu_custom_call.1} parent=11 // pred_region
          _
        $region28: #{tpu_custom_call.1} parent=11 // pred_fallthru
          _
        // Predicated region
        $region29: #{tpu_custom_call.1} parent=11 // pred_check
          %p292 = pneg %p176
        $region30: #{tpu_custom_call.1} parent=11 // pred_check_branch
          %294 = sbr.rel (%p292) target = $region32
        $region31: #{tpu_custom_call.1} parent=11 // pred_region
          _
        $region32: #{tpu_custom_call.1} parent=11 // pred_fallthru
          _
        // Predicated region
        $region33: #{tpu_custom_call.1} parent=11 // pred_check
          %p295 = pneg %p197
        $region34: #{tpu_custom_call.1} parent=11 // pred_check_branch
          %297 = sbr.rel (%p295) target = $region36
        $region35: #{tpu_custom_call.1} parent=11 // pred_region
          _
        $region36: #{tpu_custom_call.1} parent=11 // pred_fallthru
          _
        // Predicated region
        $region37: #{tpu_custom_call.1} parent=11 // pred_check
          %p298 = pneg %p218
        $region38: #{tpu_custom_call.1} parent=11 // pred_check_branch
          %300 = sbr.rel (%p298) target = $region40
        $region39: #{tpu_custom_call.1} parent=11 // pred_region
          _
        $region40: #{tpu_custom_call.1} parent=11 // pred_fallthru
          _
        // Predicated region
        $region41: #{tpu_custom_call.1} parent=11 // pred_check
          %p301 = pneg %p239
        $region42: #{tpu_custom_call.1} parent=11 // pred_check_branch
          %303 = sbr.rel (%p301) target = $region44
        $region43: #{tpu_custom_call.1} parent=11 // pred_region
          _
        $region44: #{tpu_custom_call.1} parent=11 // pred_fallthru
          _
      $region12: #{tpu_custom_call.1} parent=5 // pred_fallthru
        _
      %p304 = scmp.lt.s32.totalorder %s19, 2
      // Predicated region
      $region45: #{tpu_custom_call.1} parent=5 // pred_check
        %p305 = pneg %p304
      $region46: #{tpu_custom_call.1} parent=5 // pred_check_branch
        %307 = sbr.rel (%p305) target = $region48
      $region47: #{tpu_custom_call.1} parent=5 // pred_region
        // Predicated region
        $region49: #{tpu_custom_call.1} parent=47 // pred_check
          %p308 = pneg %p39
        $region50: #{tpu_custom_call.1} parent=47 // pred_check_branch
          %310 = sbr.rel (%p308) target = $region52
        $region51: #{tpu_custom_call.1} parent=47 // pred_region
          %p311 = scmp.lt.s32.totalorder %s19, 1
          %s312 = scalar_select %p311, %s19, 1
          %s313 = smul.addr %s312, 4
          %s314 = scalar_lea.vmem %s0, %s313
        $region52: #{tpu_custom_call.1} parent=47 // pred_fallthru
          _
        // Predicated region
        $region53: #{tpu_custom_call.1} parent=47 // pred_check
          %p315 = pneg %p65
        $region54: #{tpu_custom_call.1} parent=47 // pred_check_branch
          %317 = sbr.rel (%p315) target = $region56
        $region55: #{tpu_custom_call.1} parent=47 // pred_region
          %p318 = scmp.lt.s32.totalorder %s19, 1
          %s319 = scalar_select %p318, %s19, 1
          %s320 = scalar_lea.vmem %s1, %s319
        $region56: #{tpu_custom_call.1} parent=47 // pred_fallthru
          _
      $region48: #{tpu_custom_call.1} parent=5 // pred_fallthru
        _
      %p321 = scmp.le.s32.totalorder 1, %s19
      %p322 = scmp.lt.s32.totalorder %s19, 3
      %p323 = pnand %p321, %p322
      %p324 = pneg %p323
      // Predicated region
      $region57: #{tpu_custom_call.1} parent=5 // pred_check
        _
      $region58: #{tpu_custom_call.1} parent=5 // pred_check_branch
        %326 = sbr.rel (%p323) target = $region60
      $region59: #{tpu_custom_call.1} parent=5 // pred_region
        %s327 = ssub.s32 %s19, 1
        %p328 = scmp.lt.s32.totalorder %s24, 1
        %s329 = scalar_select %p328, %s24, 1
        %s330 = smul.addr %s329, 4
        %s331 = scalar_lea.vmem %s0, %s330
        %p332 = pneg %p45
        %p333 = pneg %p42
        %p334 = scmp.lt.s32.totalorder %s24, 1
        %s335 = scalar_select %p334, %s24, 1
        %s336 = scalar_lea.vmem %s1, %s335
        %p337 = pneg %p71
        %p338 = pneg %p68
        %p339 = pneg %p92
        %p340 = pneg %p89
        %p341 = pneg %p113
        %p342 = pneg %p110
        %p343 = pneg %p134
        %p344 = pneg %p131
        %p345 = pneg %p155
        %p346 = pneg %p152
        %p347 = pneg %p176
        %p348 = pneg %p173
        %p349 = pneg %p197
        %p350 = pneg %p194
        %p351 = pneg %p218
        %p352 = pneg %p215
        %p353 = pneg %p239
        %p354 = pneg %p236
        %p355 = pneg %p265
        %p356 = pneg %p262
        %s357 = sand.u32 %s252, 1
        %s358 = scalar_lea.sflag [#allocation3], %s357
        %s359 = sand.u32 %s252, 1
        %s360 = smul.addr %s359, 4
        %s361 = scalar_lea.vmem [#allocation2], %s360
        %p362 = scmp.lt.s32.totalorder %s24, 1
        %s363 = scalar_select %p362, %s24, 1
        %s364 = smul.addr %s363, 4
        %s365 = scalar_lea.vmem %s0, %s364
        %p366 = scmp.lt.s32.totalorder %s24, 1
        %s367 = scalar_select %p366, %s24, 1
        %s368 = scalar_lea.vmem %s1, %s367
        %v370 = vld [vmem:[%s365] sm:$0xf]
        %v371 = vld [vmem:[%s368] sm:$0x1]
        %v372 = vld [vmem:[%s2] sm:$0xf]
        %v373 = vld [vmem:[%s2 + $0x4] sm:$0xf]
        %v374 = vld [vmem:[%s2 + $0x8] sm:$0xf]
        %v375 = vld [vmem:[%s3] sm:$0xf]
        %v376 = vld [vmem:[%s3 + $0x4] sm:$0xf]
        %v377 = vld [vmem:[%s3 + $0x8] sm:$0xf]
        %v378 = vld [vmem:[%s4] sm:$0xf]
        %v379 = vld [vmem:[%s4 + $0x4] sm:$0xf]
        %v380 = vld [vmem:[%s4 + $0x8] sm:$0xf]
        %v381 = vpack.c.bf16 %v378, %v378
        %v382 = vpack.c.bf16 %v379, %v379
        %v383 = vpack.c.bf16 %v380, %v380
        %v384 = vld [vmem:[%s5] sm:$0xf]
        %v385 = vld [vmem:[%s5 + $0x4] sm:$0xf]
        %v386 = vld [vmem:[%s5 + $0x8] sm:$0xf]
        %v387 = vld [vmem:[%s6] sm:$0xf]
        %v388 = vld [vmem:[%s6 + $0x4] sm:$0xf]
        %v389 = vld [vmem:[%s6 + $0x8] sm:$0xf]
        %v390 = vld [vmem:[%s7] sm:$0xf]
        %v391 = vld [vmem:[%s7 + $0x4] sm:$0xf]
        %v392 = vld [vmem:[%s7 + $0x8] sm:$0xf]
        %v393 = vld [vmem:[%s8] sm:$0xf]
        %v394 = vld [vmem:[%s8 + $0x4] sm:$0xf]
        %v395 = vld [vmem:[%s8 + $0x8] sm:$0xf]
        %v396 = vld [vmem:[%s9] sm:$0xf]
        %v397 = vld [vmem:[%s9 + $0x4] sm:$0xf]
        %v398 = vld [vmem:[%s9 + $0x8] sm:$0xf]
        %v400 = vlaneseq
        %v401 = vshrl.u32 %v400, 7
        %v402 = vsub.s32 0, %v401
        %v403 = vrot.slane %v371, %v402
        %v405 = vmul.f32 %v370, %v403
        %407 = vrot.lane.b32.xlu0 %v405, 1
        %v408 = vpop.permute.xlu0 %407
        %vm410 = vcmask 7168
        %v411 = vsel %vm410, 0.0, %v408
        %vm412 = vcmask 138240
        %v413 = vsel %vm412, %v411, 0.0
        %415 = vset.pattern.permute.xlu0 0
        %416 = vperm.xlu0 %415, %v372
        %v417 = vpop.permute.xlu0 %416
        %v419 = vmul.f32 %v417, %v413
        %v420 = vadd.f32 %v419, 0.0
        %421 = vset.pattern.permute.xlu0 1
        %422 = vperm.xlu0 %421, %v372
        %v423 = vpop.permute.xlu0 %422
        %v425 = vmul.f32 %v423, %v413
        %427 = vrot.lane.b32.xlu0 %v425, 127
        %v428 = vpop.permute.xlu0 %427
        %v430 = vadd.f32 %v420, %v428
        %431 = vset.pattern.permute.xlu0 2
        %432 = vperm.xlu0 %431, %v372
        %v433 = vpop.permute.xlu0 %432
        %v435 = vmul.f32 %v433, %v413
        %437 = vrot.lane.b32.xlu0 %v435, 126
        %v438 = vpop.permute.xlu0 %437
        %v440 = vadd.f32 %v430, %v438
        %442 = vset.pattern.permute.xlu0 0
        %443 = vperm.xlu0 %442, %v375
        %v444 = vpop.permute.xlu0 %443
        %v446 = vadd.f32 %v440, %v444
        %vm447 = vcmask 125952
        %v448 = vsel %vm447, %v446, 0.0
        %v449 = vrot.slane %v448, 4
        %v450 = vadd.f32 %v448, %v449
        %v451 = vrot.slane %v450, 2
        %v452 = vadd.f32 %v450, %v451
        %v453 = vrot.slane %v452, 1
        %v454 = vadd.f32 %v452, %v453
        %v455 = vrcp.pop 4.0
        %v456 = vmul.f32 %v454, %v455
        %v457 = vsub.f32 %v446, %v456
        %v458 = vmul.f32 %v457, %v457
        %v459 = vsel %vm447, %v458, 0.0
        %v460 = vrot.slane %v459, 4
        %v461 = vadd.f32 %v459, %v460
        %v462 = vrot.slane %v461, 2
        %v463 = vadd.f32 %v461, %v462
        %v464 = vrot.slane %v463, 1
        %v465 = vadd.f32 %v463, %v464
        %v466 = vmul.f32 %v465, %v455
        %v467 = vadd.f32 %v466, 0.0001
        %v468 = vrsqrt.pop %v467
        %v469 = vmul.f32 %v457, %v468
        %471 = vset.pattern.permute.xlu0 0
        %472 = vperm.xlu0 %471, %v387
        %v473 = vpop.permute.xlu0 %472
        %v475 = vmul.f32 %v469, %v473
        %477 = vset.pattern.permute.xlu0 0
        %478 = vperm.xlu0 %477, %v390
        %v479 = vpop.permute.xlu0 %478
        %v481 = vadd.f32 %v475, %v479
        %v482 = vmul.f32 %v481, 0.5
        %v483 = vmul.f32 %v481, 0.70710677
        %vm484 = vcmp.ge.f32.partialorder %v483, 0.0
        %v485 = vsel %vm484, 1.0, -1.0
        %v486 = vand.u32 2147483647, %v483
        %v487 = vmul.f32 %v486, 0.3275911
        %v488 = vadd.f32 %v487, 1.0
        %v489 = vrcp.pop %v488
        %v490 = vmul.f32 1.0, %v489
        %v491 = vmul.f32 %v490, 1.0614054
        %v492 = vadd.f32 %v491, -1.4531521
        %v493 = vmul.f32 %v490, %v492
        %v494 = vadd.f32 %v493, 1.4214138
        %v495 = vmul.f32 %v490, %v494
        %v496 = vadd.f32 %v495, -0.28449672
        %v497 = vmul.f32 %v490, %v496
        %v498 = vadd.f32 %v497, 0.2548296
        %v499 = vmul.f32 %v490, %v498
        %v500 = vsub.f32 0.0, %v486
        %v501 = vmul.f32 %v500, %v486
        %v502 = vmul.f32 %v501, 1.442695
        %v503 = vpow.pop %v502
        %v504 = vmul.f32 %v499, %v503
        %v505 = vsub.f32 1.0, %v504
        %v506 = vmul.f32 %v485, %v505
        %v507 = vadd.f32 %v506, 1.0
        %v508 = vmul.f32 %v482, %v507
        %v509 = vpack.c.bf16 %v508, %v508
        %511 = vset.pattern.permute.xlu0 0
        %512 = vperm.xlu0 %511, %v384
        %v513 = vpop.permute.xlu0 %512
        %vm515 = vcmask 31744
        %v517 = vsel %vm515, %v381, 0
        %vm519 = vcmask 1041408
        %v521 = vsel %vm519, %v509, 0
        %523 = vmatprep.subr.bf16.mxu0 0
        %524 = vmatpush1.bf16.msra.mxu0 %v521
        %525 = vmatprep.subr.bf16.mxu0 0
        %526 = vmatpush1.bf16.msra.mxu0 0
        %527 = vmatprep.subr.bf16.mxu0 0
        %528 = vmatpush1.bf16.msra.mxu0 0
        %529 = vmatprep.subr.bf16.mxu0 0
        %530 = vmatpush1.bf16.msra.mxu0 0
        %531 = vmatprep.subr.bf16.mxu0 0
        %532 = vmatpush1.bf16.msra.mxu0 0
        %533 = vmatprep.subr.bf16.mxu0 0
        %534 = vmatpush1.bf16.msra.mxu0 0
        %535 = vmatprep.subr.bf16.mxu0 0
        %536 = vmatpush1.bf16.msra.mxu0 0
        %537 = vmatprep.subr.bf16.mxu0 0
        %538 = vmatpush1.bf16.msra.mxu0 0
        %539 = vmatprep.subr.bf16.mxu0 0
        %540 = vmatpush1.bf16.msra.mxu0 0
        %541 = vmatprep.subr.bf16.mxu0 0
        %542 = vmatpush1.bf16.msra.mxu0 0
        %543 = vmatprep.subr.bf16.mxu0 0
        %544 = vmatpush1.bf16.msra.mxu0 0
        %545 = vmatprep.subr.bf16.mxu0 0
        %546 = vmatpush1.bf16.msra.mxu0 0
        %547 = vmatprep.subr.bf16.mxu0 0
        %548 = vmatpush1.bf16.msra.mxu0 0
        %549 = vmatprep.subr.bf16.mxu0 0
        %550 = vmatpush1.bf16.msra.mxu0 0
        %551 = vmatprep.subr.bf16.mxu0 0
        %552 = vmatpush1.bf16.msra.mxu0 0
        %553 = vmatprep.subr.bf16.mxu0 0
        %554 = vmatpush1.bf16.msra.mxu0 0
        %555 = vmatprep.mubr.bf16.mxu0 0
        %556 = vmatmul.mubr.bf16.gmra.mrb[0].mxu0 %v517
        %v557 = vpop.f32.mrb[0].mxu0
        %v558 = vadd.f32 %v513, %v557
        %v559 = vpop.f32.mrb[0].mxu0
        %v560 = vpop.f32.mrb[0].mxu0
        %v561 = vpop.f32.mrb[0].mxu0
        %562 = vdwg.mxu0
        %v563 = vsel %vm447, %v558, 0.0
        %v564 = vrot.slane %v563, 4
        %v565 = vadd.f32 %v563, %v564
        %v566 = vrot.slane %v565, 2
        %v567 = vadd.f32 %v565, %v566
        %v568 = vrot.slane %v567, 1
        %v569 = vadd.f32 %v567, %v568
        %v570 = vmul.f32 %v569, %v455
        %v571 = vsub.f32 %v558, %v570
        %v572 = vmul.f32 %v571, %v571
        %v573 = vsel %vm447, %v572, 0.0
        %v574 = vrot.slane %v573, 4
        %v575 = vadd.f32 %v573, %v574
        %v576 = vrot.slane %v575, 2
        %v577 = vadd.f32 %v575, %v576
        %v578 = vrot.slane %v577, 1
        %v579 = vadd.f32 %v577, %v578
        %v580 = vmul.f32 %v579, %v455
        %v581 = vadd.f32 %v580, 0.0001
        %v582 = vrsqrt.pop %v581
        %v583 = vmul.f32 %v571, %v582
        %585 = vset.pattern.permute.xlu0 0
        %586 = vperm.xlu0 %585, %v393
        %v587 = vpop.permute.xlu0 %586
        %v589 = vmul.f32 %v583, %v587
        %591 = vset.pattern.permute.xlu0 0
        %592 = vperm.xlu0 %591, %v396
        %v593 = vpop.permute.xlu0 %592
        %v595 = vadd.f32 %v589, %v593
        %v596 = vmul.f32 %v595, 0.5
        %v597 = vmul.f32 %v595, 0.70710677
        %vm598 = vcmp.ge.f32.partialorder %v597, 0.0
        %v599 = vsel %vm598, 1.0, -1.0
        %v600 = vand.u32 2147483647, %v597
        %v601 = vmul.f32 %v600, 0.3275911
        %v602 = vadd.f32 %v601, 1.0
        %v603 = vrcp.pop %v602
        %v604 = vmul.f32 1.0, %v603
        %v605 = vmul.f32 %v604, 1.0614054
        %v606 = vadd.f32 %v605, -1.4531521
        %v607 = vmul.f32 %v604, %v606
        %v608 = vadd.f32 %v607, 1.4214138
        %v609 = vmul.f32 %v604, %v608
        %v610 = vadd.f32 %v609, -0.28449672
        %v611 = vmul.f32 %v604, %v610
        %v612 = vadd.f32 %v611, 0.2548296
        %v613 = vmul.f32 %v604, %v612
        %v614 = vsub.f32 0.0, %v600
        %v615 = vmul.f32 %v614, %v600
        %v616 = vmul.f32 %v615, 1.442695
        %v617 = vpow.pop %v616
        %v618 = vmul.f32 %v613, %v617
        %v619 = vsub.f32 1.0, %v618
        %v620 = vmul.f32 %v599, %v619
        %v621 = vadd.f32 %v620, 1.0
        %v622 = vmul.f32 %v596, %v621
        %v623 = vadd.f32 %v370, %v622
        %v624 = vmul.f32 %v623, %v403
        %626 = vrot.lane.b32.xlu0 %v624, 3
        %v627 = vpop.permute.xlu0 %626
        %vm629 = vcmask 23552
        %v630 = vsel %vm629, 0.0, %v627
        %vm631 = vcmask 154624
        %v632 = vsel %vm631, %v630, 0.0
        %634 = vset.pattern.permute.xlu0 0
        %635 = vperm.xlu0 %634, %v373
        %v636 = vpop.permute.xlu0 %635
        %v638 = vmul.f32 %v636, %v632
        %v639 = vadd.f32 %v638, 0.0
        %640 = vset.pattern.permute.xlu0 1
        %641 = vperm.xlu0 %640, %v373
        %v642 = vpop.permute.xlu0 %641
        %v644 = vmul.f32 %v642, %v632
        %646 = vrot.lane.b32.xlu0 %v644, 125
        %v647 = vpop.permute.xlu0 %646
        %v649 = vadd.f32 %v639, %v647
        %650 = vset.pattern.permute.xlu0 2
        %651 = vperm.xlu0 %650, %v373
        %v652 = vpop.permute.xlu0 %651
        %v654 = vmul.f32 %v652, %v632
        %656 = vrot.lane.b32.xlu0 %v654, 122
        %v657 = vpop.permute.xlu0 %656
        %v659 = vadd.f32 %v649, %v657
        %661 = vset.pattern.permute.xlu0 0
        %662 = vperm.xlu0 %661, %v376
        %v663 = vpop.permute.xlu0 %662
        %v665 = vadd.f32 %v659, %v663
        %v666 = vsel %vm447, %v665, 0.0
        %v667 = vrot.slane %v666, 4
        %v668 = vadd.f32 %v666, %v667
        %v669 = vrot.slane %v668, 2
        %v670 = vadd.f32 %v668, %v669
        %v671 = vrot.slane %v670, 1
        %v672 = vadd.f32 %v670, %v671
        %v673 = vmul.f32 %v672, %v455
        %v674 = vsub.f32 %v665, %v673
        %v675 = vmul.f32 %v674, %v674
        %v676 = vsel %vm447, %v675, 0.0
        %v677 = vrot.slane %v676, 4
        %v678 = vadd.f32 %v676, %v677
        %v679 = vrot.slane %v678, 2
        %v680 = vadd.f32 %v678, %v679
        %v681 = vrot.slane %v680, 1
        %v682 = vadd.f32 %v680, %v681
        %v683 = vmul.f32 %v682, %v455
        %v684 = vadd.f32 %v683, 0.0001
        %v685 = vrsqrt.pop %v684
        %v686 = vmul.f32 %v674, %v685
        %688 = vset.pattern.permute.xlu0 0
        %689 = vperm.xlu0 %688, %v388
        %v690 = vpop.permute.xlu0 %689
        %v692 = vmul.f32 %v686, %v690
        %694 = vset.pattern.permute.xlu0 0
        %695 = vperm.xlu0 %694, %v391
        %v696 = vpop.permute.xlu0 %695
        %v698 = vadd.f32 %v692, %v696
        %v699 = vmul.f32 %v698, 0.5
        %v700 = vmul.f32 %v698, 0.70710677
        %vm701 = vcmp.ge.f32.partialorder %v700, 0.0
        %v702 = vsel %vm701, 1.0, -1.0
        %v703 = vand.u32 2147483647, %v700
        %v704 = vmul.f32 %v703, 0.3275911
        %v705 = vadd.f32 %v704, 1.0
        %v706 = vrcp.pop %v705
        %v707 = vmul.f32 1.0, %v706
        %v708 = vmul.f32 %v707, 1.0614054
        %v709 = vadd.f32 %v708, -1.4531521
        %v710 = vmul.f32 %v707, %v709
        %v711 = vadd.f32 %v710, 1.4214138
        %v712 = vmul.f32 %v707, %v711
        %v713 = vadd.f32 %v712, -0.28449672
        %v714 = vmul.f32 %v707, %v713
        %v715 = vadd.f32 %v714, 0.2548296
        %v716 = vmul.f32 %v707, %v715
        %v717 = vsub.f32 0.0, %v703
        %v718 = vmul.f32 %v717, %v703
        %v719 = vmul.f32 %v718, 1.442695
        %v720 = vpow.pop %v719
        %v721 = vmul.f32 %v716, %v720
        %v722 = vsub.f32 1.0, %v721
        %v723 = vmul.f32 %v702, %v722
        %v724 = vadd.f32 %v723, 1.0
        %v725 = vmul.f32 %v699, %v724
        %v726 = vpack.c.bf16 %v725, %v725
        %728 = vset.pattern.permute.xlu0 0
        %729 = vperm.xlu0 %728, %v385
        %v730 = vpop.permute.xlu0 %729
        %v733 = vsel %vm515, %v382, 0
        %v736 = vsel %vm519, %v726, 0
        %738 = vmatprep.subr.bf16.mxu0 0
        %739 = vmatpush1.bf16.msra.mxu0 %v736
        %740 = vmatprep.subr.bf16.mxu0 0
        %741 = vmatpush1.bf16.msra.mxu0 0
        %742 = vmatprep.subr.bf16.mxu0 0
        %743 = vmatpush1.bf16.msra.mxu0 0
        %744 = vmatprep.subr.bf16.mxu0 0
        %745 = vmatpush1.bf16.msra.mxu0 0
        %746 = vmatprep.subr.bf16.mxu0 0
        %747 = vmatpush1.bf16.msra.mxu0 0
        %748 = vmatprep.subr.bf16.mxu0 0
        %749 = vmatpush1.bf16.msra.mxu0 0
        %750 = vmatprep.subr.bf16.mxu0 0
        %751 = vmatpush1.bf16.msra.mxu0 0
        %752 = vmatprep.subr.bf16.mxu0 0
        %753 = vmatpush1.bf16.msra.mxu0 0
        %754 = vmatprep.subr.bf16.mxu0 0
        %755 = vmatpush1.bf16.msra.mxu0 0
        %756 = vmatprep.subr.bf16.mxu0 0
        %757 = vmatpush1.bf16.msra.mxu0 0
        %758 = vmatprep.subr.bf16.mxu0 0
        %759 = vmatpush1.bf16.msra.mxu0 0
        %760 = vmatprep.subr.bf16.mxu0 0
        %761 = vmatpush1.bf16.msra.mxu0 0
        %762 = vmatprep.subr.bf16.mxu0 0
        %763 = vmatpush1.bf16.msra.mxu0 0
        %764 = vmatprep.subr.bf16.mxu0 0
        %765 = vmatpush1.bf16.msra.mxu0 0
        %766 = vmatprep.subr.bf16.mxu0 0
        %767 = vmatpush1.bf16.msra.mxu0 0
        %768 = vmatprep.subr.bf16.mxu0 0
        %769 = vmatpush1.bf16.msra.mxu0 0
        %770 = vmatprep.mubr.bf16.mxu0 0
        %771 = vmatmul.mubr.bf16.gmra.mrb[0].mxu0 %v733
        %v772 = vpop.f32.mrb[0].mxu0
        %v773 = vadd.f32 %v730, %v772
        %v774 = vpop.f32.mrb[0].mxu0
        %v775 = vpop.f32.mrb[0].mxu0
        %v776 = vpop.f32.mrb[0].mxu0
        %777 = vdwg.mxu0
        %v778 = vsel %vm447, %v773, 0.0
        %v779 = vrot.slane %v778, 4
        %v780 = vadd.f32 %v778, %v779
        %v781 = vrot.slane %v780, 2
        %v782 = vadd.f32 %v780, %v781
        %v783 = vrot.slane %v782, 1
        %v784 = vadd.f32 %v782, %v783
        %v785 = vmul.f32 %v784, %v455
        %v786 = vsub.f32 %v773, %v785
        %v787 = vmul.f32 %v786, %v786
        %v788 = vsel %vm447, %v787, 0.0
        %v789 = vrot.slane %v788, 4
        %v790 = vadd.f32 %v788, %v789
        %v791 = vrot.slane %v790, 2
        %v792 = vadd.f32 %v790, %v791
        %v793 = vrot.slane %v792, 1
        %v794 = vadd.f32 %v792, %v793
        %v795 = vmul.f32 %v794, %v455
        %v796 = vadd.f32 %v795, 0.0001
        %v797 = vrsqrt.pop %v796
        %v798 = vmul.f32 %v786, %v797
        %800 = vset.pattern.permute.xlu0 0
        %801 = vperm.xlu0 %800, %v394
        %v802 = vpop.permute.xlu0 %801
        %v804 = vmul.f32 %v798, %v802
        %806 = vset.pattern.permute.xlu0 0
        %807 = vperm.xlu0 %806, %v397
        %v808 = vpop.permute.xlu0 %807
        %v810 = vadd.f32 %v804, %v808
        %v811 = vmul.f32 %v810, 0.5
        %v812 = vmul.f32 %v810, 0.70710677
        %vm813 = vcmp.ge.f32.partialorder %v812, 0.0
        %v814 = vsel %vm813, 1.0, -1.0
        %v815 = vand.u32 2147483647, %v812
        %v816 = vmul.f32 %v815, 0.3275911
        %v817 = vadd.f32 %v816, 1.0
        %v818 = vrcp.pop %v817
        %v819 = vmul.f32 1.0, %v818
        %v820 = vmul.f32 %v819, 1.0614054
        %v821 = vadd.f32 %v820, -1.4531521
        %v822 = vmul.f32 %v819, %v821
        %v823 = vadd.f32 %v822, 1.4214138
        %v824 = vmul.f32 %v819, %v823
        %v825 = vadd.f32 %v824, -0.28449672
        %v826 = vmul.f32 %v819, %v825
        %v827 = vadd.f32 %v826, 0.2548296
        %v828 = vmul.f32 %v819, %v827
        %v829 = vsub.f32 0.0, %v815
        %v830 = vmul.f32 %v829, %v815
        %v831 = vmul.f32 %v830, 1.442695
        %v832 = vpow.pop %v831
        %v833 = vmul.f32 %v828, %v832
        %v834 = vsub.f32 1.0, %v833
        %v835 = vmul.f32 %v814, %v834
        %v836 = vadd.f32 %v835, 1.0
        %v837 = vmul.f32 %v811, %v836
        %v838 = vadd.f32 %v623, %v837
        %v839 = vmul.f32 %v838, %v403
        %841 = vrot.lane.b32.xlu0 %v839, 9
        %v842 = vpop.permute.xlu0 %841
        %vm844 = vcmask 72704
        %v845 = vsel %vm844, 0.0, %v842
        %vm846 = vcmask 203776
        %v847 = vsel %vm846, %v845, 0.0
        %849 = vset.pattern.permute.xlu0 0
        %850 = vperm.xlu0 %849, %v374
        %v851 = vpop.permute.xlu0 %850
        %v853 = vmul.f32 %v851, %v847
        %v854 = vadd.f32 %v853, 0.0
        %855 = vset.pattern.permute.xlu0 1
        %856 = vperm.xlu0 %855, %v374
        %v857 = vpop.permute.xlu0 %856
        %v859 = vmul.f32 %v857, %v847
        %861 = vrot.lane.b32.xlu0 %v859, 119
        %v862 = vpop.permute.xlu0 %861
        %v864 = vadd.f32 %v854, %v862
        %865 = vset.pattern.permute.xlu0 2
        %866 = vperm.xlu0 %865, %v374
        %v867 = vpop.permute.xlu0 %866
        %v869 = vmul.f32 %v867, %v847
        %871 = vrot.lane.b32.xlu0 %v869, 110
        %v872 = vpop.permute.xlu0 %871
        %v874 = vadd.f32 %v864, %v872
        %876 = vset.pattern.permute.xlu0 0
        %877 = vperm.xlu0 %876, %v377
        %v878 = vpop.permute.xlu0 %877
        %v880 = vadd.f32 %v874, %v878
        %v881 = vsel %vm447, %v880, 0.0
        %v882 = vrot.slane %v881, 4
        %v883 = vadd.f32 %v881, %v882
        %v884 = vrot.slane %v883, 2
        %v885 = vadd.f32 %v883, %v884
        %v886 = vrot.slane %v885, 1
        %v887 = vadd.f32 %v885, %v886
        %v888 = vmul.f32 %v887, %v455
        %v889 = vsub.f32 %v880, %v888
        %v890 = vmul.f32 %v889, %v889
        %v891 = vsel %vm447, %v890, 0.0
        %v892 = vrot.slane %v891, 4
        %v893 = vadd.f32 %v891, %v892
        %v894 = vrot.slane %v893, 2
        %v895 = vadd.f32 %v893, %v894
        %v896 = vrot.slane %v895, 1
        %v897 = vadd.f32 %v895, %v896
        %v898 = vmul.f32 %v897, %v455
        %v899 = vadd.f32 %v898, 0.0001
        %v900 = vrsqrt.pop %v899
        %v901 = vmul.f32 %v889, %v900
        %903 = vset.pattern.permute.xlu0 0
        %904 = vperm.xlu0 %903, %v389
        %v905 = vpop.permute.xlu0 %904
        %v907 = vmul.f32 %v901, %v905
        %909 = vset.pattern.permute.xlu0 0
        %910 = vperm.xlu0 %909, %v392
        %v911 = vpop.permute.xlu0 %910
        %v913 = vadd.f32 %v907, %v911
        %v914 = vmul.f32 %v913, 0.5
        %v915 = vmul.f32 %v913, 0.70710677
        %vm916 = vcmp.ge.f32.partialorder %v915, 0.0
        %v917 = vsel %vm916, 1.0, -1.0
        %v918 = vand.u32 2147483647, %v915
        %v919 = vmul.f32 %v918, 0.3275911
        %v920 = vadd.f32 %v919, 1.0
        %v921 = vrcp.pop %v920
        %v922 = vmul.f32 1.0, %v921
        %v923 = vmul.f32 %v922, 1.0614054
        %v924 = vadd.f32 %v923, -1.4531521
        %v925 = vmul.f32 %v922, %v924
        %v926 = vadd.f32 %v925, 1.4214138
        %v927 = vmul.f32 %v922, %v926
        %v928 = vadd.f32 %v927, -0.28449672
        %v929 = vmul.f32 %v922, %v928
        %v930 = vadd.f32 %v929, 0.2548296
        %v931 = vmul.f32 %v922, %v930
        %v932 = vsub.f32 0.0, %v918
        %v933 = vmul.f32 %v932, %v918
        %v934 = vmul.f32 %v933, 1.442695
        %v935 = vpow.pop %v934
        %v936 = vmul.f32 %v931, %v935
        %v937 = vsub.f32 1.0, %v936
        %v938 = vmul.f32 %v917, %v937
        %v939 = vadd.f32 %v938, 1.0
        %v940 = vmul.f32 %v914, %v939
        %v941 = vpack.c.bf16 %v940, %v940
        %943 = vset.pattern.permute.xlu0 0
        %944 = vperm.xlu0 %943, %v386
        %v945 = vpop.permute.xlu0 %944
        %v948 = vsel %vm515, %v383, 0
        %v951 = vsel %vm519, %v941, 0
        %953 = vmatprep.subr.bf16.mxu0 0
        %954 = vmatpush1.bf16.msra.mxu0 %v951
        %955 = vmatprep.subr.bf16.mxu0 0
        %956 = vmatpush1.bf16.msra.mxu0 0
        %957 = vmatprep.subr.bf16.mxu0 0
        %958 = vmatpush1.bf16.msra.mxu0 0
        %959 = vmatprep.subr.bf16.mxu0 0
        %960 = vmatpush1.bf16.msra.mxu0 0
        %961 = vmatprep.subr.bf16.mxu0 0
        %962 = vmatpush1.bf16.msra.mxu0 0
        %963 = vmatprep.subr.bf16.mxu0 0
        %964 = vmatpush1.bf16.msra.mxu0 0
        %965 = vmatprep.subr.bf16.mxu0 0
        %966 = vmatpush1.bf16.msra.mxu0 0
        %967 = vmatprep.subr.bf16.mxu0 0
        %968 = vmatpush1.bf16.msra.mxu0 0
        %969 = vmatprep.subr.bf16.mxu0 0
        %970 = vmatpush1.bf16.msra.mxu0 0
        %971 = vmatprep.subr.bf16.mxu0 0
        %972 = vmatpush1.bf16.msra.mxu0 0
        %973 = vmatprep.subr.bf16.mxu0 0
        %974 = vmatpush1.bf16.msra.mxu0 0
        %975 = vmatprep.subr.bf16.mxu0 0
        %976 = vmatpush1.bf16.msra.mxu0 0
        %977 = vmatprep.subr.bf16.mxu0 0
        %978 = vmatpush1.bf16.msra.mxu0 0
        %979 = vmatprep.subr.bf16.mxu0 0
        %980 = vmatpush1.bf16.msra.mxu0 0
        %981 = vmatprep.subr.bf16.mxu0 0
        %982 = vmatpush1.bf16.msra.mxu0 0
        %983 = vmatprep.subr.bf16.mxu0 0
        %984 = vmatpush1.bf16.msra.mxu0 0
        %985 = vmatprep.mubr.bf16.mxu0 0
        %986 = vmatmul.mubr.bf16.gmra.mrb[0].mxu0 %v948
        %v987 = vpop.f32.mrb[0].mxu0
        %v988 = vadd.f32 %v945, %v987
        %v989 = vpop.f32.mrb[0].mxu0
        %v990 = vpop.f32.mrb[0].mxu0
        %v991 = vpop.f32.mrb[0].mxu0
        %992 = vdwg.mxu0
        %v993 = vsel %vm447, %v988, 0.0
        %v994 = vrot.slane %v993, 4
        %v995 = vadd.f32 %v993, %v994
        %v996 = vrot.slane %v995, 2
        %v997 = vadd.f32 %v995, %v996
        %v998 = vrot.slane %v997, 1
        %v999 = vadd.f32 %v997, %v998
        %v1000 = vmul.f32 %v999, %v455
        %v1001 = vsub.f32 %v988, %v1000
        %v1002 = vmul.f32 %v1001, %v1001
        %v1003 = vsel %vm447, %v1002, 0.0
        %v1004 = vrot.slane %v1003, 4
        %v1005 = vadd.f32 %v1003, %v1004
        %v1006 = vrot.slane %v1005, 2
        %v1007 = vadd.f32 %v1005, %v1006
        %v1008 = vrot.slane %v1007, 1
        %v1009 = vadd.f32 %v1007, %v1008
        %v1010 = vmul.f32 %v1009, %v455
        %v1011 = vadd.f32 %v1010, 0.0001
        %v1012 = vrsqrt.pop %v1011
        %v1013 = vmul.f32 %v1001, %v1012
        %1015 = vset.pattern.permute.xlu0 0
        %1016 = vperm.xlu0 %1015, %v395
        %v1017 = vpop.permute.xlu0 %1016
        %v1019 = vmul.f32 %v1013, %v1017
        %1021 = vset.pattern.permute.xlu0 0
        %1022 = vperm.xlu0 %1021, %v398
        %v1023 = vpop.permute.xlu0 %1022
        %v1025 = vadd.f32 %v1019, %v1023
        %v1026 = vmul.f32 %v1025, 0.5
        %v1027 = vmul.f32 %v1025, 0.70710677
        %vm1028 = vcmp.ge.f32.partialorder %v1027, 0.0
        %v1029 = vsel %vm1028, 1.0, -1.0
        %v1030 = vand.u32 2147483647, %v1027
        %v1031 = vmul.f32 %v1030, 0.3275911
        %v1032 = vadd.f32 %v1031, 1.0
        %v1033 = vrcp.pop %v1032
        %v1034 = vmul.f32 1.0, %v1033
        %v1035 = vmul.f32 %v1034, 1.0614054
        %v1036 = vadd.f32 %v1035, -1.4531521
        %v1037 = vmul.f32 %v1034, %v1036
        %v1038 = vadd.f32 %v1037, 1.4214138
        %v1039 = vmul.f32 %v1034, %v1038
        %v1040 = vadd.f32 %v1039, -0.28449672
        %v1041 = vmul.f32 %v1034, %v1040
        %v1042 = vadd.f32 %v1041, 0.2548296
        %v1043 = vmul.f32 %v1034, %v1042
        %v1044 = vsub.f32 0.0, %v1030
        %v1045 = vmul.f32 %v1044, %v1030
        %v1046 = vmul.f32 %v1045, 1.442695
        %v1047 = vpow.pop %v1046
        %v1048 = vmul.f32 %v1043, %v1047
        %v1049 = vsub.f32 1.0, %v1048
        %v1050 = vmul.f32 %v1029, %v1049
        %v1051 = vadd.f32 %v1050, 1.0
        %v1052 = vmul.f32 %v1026, %v1051
        %v1053 = vadd.f32 %v838, %v1052
        %v1054 = vmul.f32 %v1053, %v403
        %1055 = vst.msk [vmem:[%s361] sm:$0xf] %vm447, %v1054
        %s1056 = sand.u32 %s252, 1
        %s1057 = scalar_lea.sflag [#allocation3], %s1056
        %s1058 = sand.u32 %s252, 1
        %s1059 = smul.addr %s1058, 4
        %s1060 = scalar_lea.vmem [#allocation2], %s1059
        // Predicated region
        $region61: #{tpu_custom_call.1} parent=59 // pred_check
          %p1061 = pneg %p262
        $region62: #{tpu_custom_call.1} parent=59 // pred_check_branch
          %1063 = sbr.rel (%p1061) target = $region64
        $region63: #{tpu_custom_call.1} parent=59 // pred_region
          %s1065 = ssub.s32 64, 64
          %1066 = vsyncadd %s1057, %s1065
          %s1067 = smul.addr %s24, 64
          %s1068 = scalar_lea.hbm %s10, %s1067
          %s1070 = sshll.u32 %s1060, 4
          %s1071 = int_to_ptr.vmem [resolvable:$true] %s1070
          %1073 = dma.vmem_to_hbm [thread:$0]  %s1071, 64, %s1068, %s1057
        $region64: #{tpu_custom_call.1} parent=59 // pred_fallthru
          _
      $region60: #{tpu_custom_call.1} parent=5 // pred_fallthru
        _
      %p1074 = scmp.le.s32.totalorder 2, %s19
      // Predicated region
      $region65: #{tpu_custom_call.1} parent=5 // pred_check
        %p1075 = pneg %p1074
      $region66: #{tpu_custom_call.1} parent=5 // pred_check_branch
        %1077 = sbr.rel (%p1075) target = $region68
      $region67: #{tpu_custom_call.1} parent=5 // pred_region
        %s1078 = ssub.s32 %s19, 2
        // Predicated region
        $region69: #{tpu_custom_call.1} parent=67 // pred_check
          %p1079 = pneg %p268
        $region70: #{tpu_custom_call.1} parent=67 // pred_check_branch
          %1081 = sbr.rel (%p1079) target = $region72
        $region71: #{tpu_custom_call.1} parent=67 // pred_region
          %s1082 = sand.u32 %s253, 1
          %s1083 = scalar_lea.sflag [#allocation3], %s1082
          %s1084 = sand.u32 %s253, 1
          %s1085 = smul.addr %s1084, 4
          %s1086 = scalar_lea.vmem [#allocation2], %s1085
          %1087 = dma.done %s1083, 64
        $region72: #{tpu_custom_call.1} parent=67 // pred_fallthru
          _
      $region68: #{tpu_custom_call.1} parent=5 // pred_fallthru
        _
    $region6: #{tpu_custom_call.1} parent=1 // loop_footer
      %s23 = sadd.s32 1, %s19
    $region7: #{tpu_custom_call.1} parent=1 // loop_footer_branch
      %18 = sbr.rel target = $region3
    $region8: #{tpu_custom_call.1} parent=1 // loop_exit
      _
    %1088 = vsyncpa [#allocation3], 1
    %s1089 = scalar_lea.sflag [#allocation3], 1
    %1090 = vsyncpa %s1089, 1

</llo_original>
